<compile_context>
chip_gen: v7x
topology: tpu7x:2x2x1
jax: 0.10.0
libtpu: 0.0.40
codegen_flags: <defaults>
</compile_context>

<pallas_src>
import functools

import numpy as np
import jax
import jax.numpy as jnp
from jax.experimental import pallas as pl
from jax.experimental.pallas import tpu as pltpu

_BN_EPS = 1e-5
_LANE = 128
_SUBLANE_BF16 = 16
_STAGE2_VMEM_BUDGET = 12 * 1024 * 1024   # <= v5e's 16 MiB scoped default
_TRUNK_MAX_ROWS = 4096                   # whole-batch BN trunk VMEM guard


def _round_up(x, m):
    return ((x + m - 1) // m) * m


# ---------------------------------------------------------------------------
# Shared trunk computation: Linear -> BN(train) -> ReLU, three times. All f32.
# ---------------------------------------------------------------------------
def _trunk_compute(z_ref,
                   w1_ref, b1_ref, g1_ref, be1_ref,
                   w2_ref, b2_ref, g2_ref, be2_ref,
                   w3_ref, b3_ref, g3_ref, be3_ref):
    def lin(x, w_ref, b_ref):
        return jnp.dot(x, w_ref[...], preferred_element_type=jnp.float32) + b_ref[...]

    def bn_relu(hh, g_ref, be_ref):
        mean = jnp.mean(hh, axis=0, keepdims=True)
        var = jnp.mean((hh - mean) * (hh - mean), axis=0, keepdims=True)
        hn = (hh - mean) * jax.lax.rsqrt(var + _BN_EPS)
        return jnp.maximum(hn * g_ref[...] + be_ref[...], 0.0)

    x = z_ref[...].astype(jnp.float32)
    x = bn_relu(lin(x, w1_ref, b1_ref), g1_ref, be1_ref)
    x = bn_relu(lin(x, w2_ref, b2_ref), g2_ref, be2_ref)
    x = bn_relu(lin(x, w3_ref, b3_ref), g3_ref, be3_ref)
    return x  # (B, 256) f32


# ---------------------------------------------------------------------------
# Stage 1 kernel (whole batch): trunk only, bf16 hand-off to stage 2.
# ---------------------------------------------------------------------------
def _trunk_kernel(z_ref,
                  w1_ref, b1_ref, g1_ref, be1_ref,
                  w2_ref, b2_ref, g2_ref, be2_ref,
                  w3_ref, b3_ref, g3_ref, be3_ref,
                  o_ref):
    h3 = _trunk_compute(z_ref,
                        w1_ref, b1_ref, g1_ref, be1_ref,
                        w2_ref, b2_ref, g2_ref, be2_ref,
                        w3_ref, b3_ref, g3_ref, be3_ref)
    o_ref[...] = h3.astype(o_ref.dtype)


# ---------------------------------------------------------------------------
# Fused small-batch kernel: trunk + final Linear + Sigmoid in one call.
# ---------------------------------------------------------------------------
def _fused_kernel(z_ref,
                  w1_ref, b1_ref, g1_ref, be1_ref,
                  w2_ref, b2_ref, g2_ref, be2_ref,
                  w3_ref, b3_ref, g3_ref, be3_ref,
                  w4_ref, b4_ref, o_ref):
    h3 = _trunk_compute(z_ref,
                        w1_ref, b1_ref, g1_ref, be1_ref,
                        w2_ref, b2_ref, g2_ref, be2_ref,
                        w3_ref, b3_ref, g3_ref, be3_ref).astype(jnp.bfloat16)
    acc = jnp.dot(h3, w4_ref[...], preferred_element_type=jnp.float32) + b4_ref[...]
    # sigmoid(x) == 0.5 * (tanh(0.5 * x) + 1): one EUP op instead of exp+divide
    o_ref[...] = (0.5 * jnp.tanh(0.5 * acc) + 0.5).astype(o_ref.dtype)


# ---------------------------------------------------------------------------
# Stage 2 kernel (batch x N tiled): Linear(256 -> cwh) + Sigmoid.
# ---------------------------------------------------------------------------
def _final_kernel(x_ref, w_ref, b_ref, o_ref):
    acc = jnp.dot(x_ref[...], w_ref[...], preferred_element_type=jnp.float32)
    acc = acc + b_ref[...]
    o_ref[...] = (0.5 * jnp.tanh(0.5 * acc) + 0.5).astype(o_ref.dtype)


def _pick_stage2_tiles(batch, cwh_pad, out_itemsize):
    """(tb, tn): batch-tile rows (x16) and lane-dense N tile (x128)."""
    # N tile: keep the whole bf16 weight resident when it is small, otherwise
    # stream 128-multiple column tiles along a second grid axis.
    if 256 * cwh_pad * 2 <= 4 * 1024 * 1024:
        tn = cwh_pad
        w_bufs = 1                      # constant block -> single-buffered
    else:
        tn = 4096
        w_bufs = 2                      # streamed over N -> double-buffered
    fixed = w_bufs * (256 * tn * 2 + tn * 4)            # weight + bias tiles
    per_row = 2 * (256 * 2) + 2 * (tn * out_itemsize)   # dbl-buffered in/out rows
    tb_max = max(_SUBLANE_BF16,
                 ((_STAGE2_VMEM_BUDGET - fixed) // per_row)
                 // _SUBLANE_BF16 * _SUBLANE_BF16)
    # >=2 batch tiles whenever possible so the "parallel" batch axis can shard
    # across v7x's two TensorCores (harmless single-tile no-op for tiny B).
    tb_split = _round_up(pl.cdiv(batch, 2), _SUBLANE_BF16)
    tb = int(min(tb_max, max(_SUBLANE_BF16, tb_split), 1024))
    return tb, tn


def init_decoder_params(key, shape, nhid=16, ncond=0, dtype=jnp.float32):
    """Deterministic parameter init mirroring the layer shapes of Decoder.__init__."""
    c, w, h = shape
    dims = [nhid + ncond, 64, 128, 256, c * w * h]
    params = {}
    keys = jax.random.split(key, len(dims) - 1)
    for i, (din, dout) in enumerate(zip(dims[:-1], dims[1:])):
        kw, kb = jax.random.split(keys[i])
        scale = 1.0 / jnp.sqrt(jnp.float32(din))
        # weights stored as (in, out); PyTorch Linear stores (out, in), does x @ W.T
        params[f"w{i}"] = (jax.random.uniform(kw, (din, dout), dtype,
                                              minval=-1.0, maxval=1.0) * scale)
        params[f"b{i}"] = (jax.random.uniform(kb, (1, dout), dtype,
                                              minval=-1.0, maxval=1.0) * scale)
        if i < len(dims) - 2:  # BatchNorm1d after every layer except the last
            params[f"g{i}"] = jnp.ones((1, dout), dtype)
            params[f"beta{i}"] = jnp.zeros((1, dout), dtype)
    return params


@functools.partial(jax.jit, static_argnames=("shape", "out_dtype"))
def decoder_forward(z, params, shape, y=None, out_dtype=jnp.float32):
    """Pallas-backed Decoder.forward.  z: (B, nhid), y: optional (B, ncond)."""
    c, w, h = shape
    cwh = c * w * h
    if y is not None:
        z = jnp.concatenate((z, y), axis=1)  # torch.cat((z, y), dim=1)
    B = z.shape[0]
    if B > _TRUNK_MAX_ROWS:
        # TODO(synk): batch-chunked two-pass BatchNorm (sum/sumsq scratch) for
        # batches whose whole-batch trunk would not fit in VMEM.
        raise ValueError(
            f"decoder_forward: batch {B} > {_TRUNK_MAX_ROWS}; whole-batch "
            "BatchNorm trunk would exceed VMEM.")

    f32 = lambda p: p.astype(jnp.float32)
    out_itemsize = np.dtype(out_dtype).itemsize
    vmem = pl.BlockSpec(memory_space=pltpu.MemorySpace.VMEM)

    trunk_ops = (
        z.astype(jnp.float32),
        f32(params["w0"]), f32(params["b0"]), f32(params["g0"]), f32(params["beta0"]),
        f32(params["w1"]), f32(params["b1"]), f32(params["g1"]), f32(params["beta1"]),
        f32(params["w2"]), f32(params["b2"]), f32(params["g2"]), f32(params["beta2"]),
    )
    w3_bf16 = params["w3"].astype(jnp.bfloat16)
    b3_f32 = f32(params["b3"])

    # ---- Fused small-batch path: everything in one kernel, no h3 round trip.
    fused_bytes = (256 * cwh * 2 + cwh * 4          # final weight + bias
                   + B * cwh * out_itemsize          # output slab
                   + B * 6 * 1024)                   # trunk activations (rough)
    if B <= 128 and fused_bytes <= 8 * 1024 * 1024:
        out = pl.pallas_call(
            _fused_kernel,
            out_shape=jax.ShapeDtypeStruct((B, cwh), out_dtype),
            in_specs=[vmem] * (len(trunk_ops) + 2),
            out_specs=vmem,
        )(*trunk_ops, w3_bf16, b3_f32)
        return out.reshape(B, c, w, h)

    # ---- Stage 1: whole-batch BN trunk (nhid -> 64 -> 128 -> 256), f32 math.
    trunk_vmem = int(min(48 * 1024 * 1024,
                         max(16 * 1024 * 1024, B * 8 * 1024 + 2 * 1024 * 1024)))
    h3 = pl.pallas_call(
        _trunk_kernel,
        out_shape=jax.ShapeDtypeStruct((B, 256), jnp.bfloat16),
        in_specs=[vmem] * len(trunk_ops),
        out_specs=vmem,
        compiler_params=pltpu.CompilerParams(vmem_limit_bytes=trunk_vmem),
    )(*trunk_ops)

    # ---- Stage 2: (batch x N)-tiled Linear(256 -> cwh) + sigmoid ------------
    cwh_pad0 = _round_up(cwh, _LANE)                 # lane-dense stores
    tb, tn = _pick_stage2_tiles(B, cwh_pad0, out_itemsize)
    n_n = pl.cdiv(cwh_pad0, tn)
    cwh_pad = n_n * tn
    if cwh_pad != cwh:                               # pad weight/bias columns only
        w3_bf16 = jnp.pad(w3_bf16, ((0, 0), (0, cwh_pad - cwh)))
        b3_f32 = jnp.pad(b3_f32, ((0, 0), (0, cwh_pad - cwh)))
    n_b = pl.cdiv(B, tb)                             # ragged last tile is masked

    # Constant weight/bias blocks (single N tile) don't need double buffering.
    w_mode = pl.Buffered(1) if n_n == 1 else None

    out = pl.pallas_call(
        _final_kernel,
        out_shape=jax.ShapeDtypeStruct((B, cwh), out_dtype),   # unpadded: no slice
        grid=(n_b, n_n),
        in_specs=[
            pl.BlockSpec((tb, 256), lambda i, j: (i, 0)),       # batch tile of h3
            pl.BlockSpec((256, tn), lambda i, j: (0, j), pipeline_mode=w_mode),
            pl.BlockSpec((1, tn), lambda i, j: (0, j), pipeline_mode=w_mode),
        ],
        out_specs=pl.BlockSpec((tb, tn), lambda i, j: (i, j)),
        compiler_params=pltpu.CompilerParams(
            dimension_semantics=("parallel", "parallel")),      # 2-TC shard on v7x
    )(h3, w3_bf16, b3_f32)

    return out.reshape(B, c, w, h)


# ---------------------------------------------------------------------------
# Pure-JAX reference (f32) for correctness checking.
# ---------------------------------------------------------------------------
def decoder_reference(z, params, shape, y=None):
    c, w, h = shape
    if y is not None:
        z = jnp.concatenate((z, y), axis=1)
    x = z.astype(jnp.float32)
    for i in range(3):
        x = x @ params[f"w{i}"].astype(jnp.float32) + params[f"b{i}"].astype(jnp.float32)
        mean = jnp.mean(x, axis=0, keepdims=True)
        var = jnp.mean((x - mean) ** 2, axis=0, keepdims=True)
        x = (x - mean) * jax.lax.rsqrt(var + _BN_EPS)
        x = jnp.maximum(x * params[f"g{i}"] + params[f"beta{i}"], 0.0)
    x = x @ params["w3"].astype(jnp.float32) + params["b3"].astype(jnp.float32)
    x = jax.nn.sigmoid(x)
    return x.reshape(-1, c, w, h)


if __name__ == "__main__":
    # Small shapes consistent with the module: shape=(c, w, h)=(4, 16, 16), nhid=16.
    shape = (4, 16, 16)
    nhid = 16

    key = jax.random.PRNGKey(0)
    kz1, kz2, kp = jax.random.split(key, 3)
    params = init_decoder_params(kp, shape, nhid=nhid, ncond=0)

    # 1) Tiny batch -> fused single-kernel path.
    z_small = jax.random.normal(kz1, (2, nhid), jnp.float32)
    out_small = jax.block_until_ready(decoder_forward(z_small, params, shape))
    assert out_small.shape == (2,) + shape, out_small.shape
    assert bool(jnp.all(jnp.isfinite(out_small)))
    assert bool(jnp.all((out_small >= 0.0) & (out_small <= 1.0)))
    ref_small = decoder_reference(z_small, params, shape)
    assert float(jnp.max(jnp.abs(out_small - ref_small))) < 5e-2

    # 2) Larger batch -> two-stage path (batch-tiled grid with a ragged tail).
    z_big = jax.random.normal(kz2, (200, nhid), jnp.float32)
    out_big = jax.block_until_ready(decoder_forward(z_big, params, shape))
    assert out_big.shape == (200,) + shape, out_big.shape
    assert bool(jnp.all(jnp.isfinite(out_big)))
    assert bool(jnp.all((out_big >= 0.0) & (out_big <= 1.0)))
    ref_big = decoder_reference(z_big, params, shape)
    assert float(jnp.max(jnp.abs(out_big - ref_big))) < 5e-2

    print("KERNEL_OK")
</pallas_src>

<mosaic_0001>
module attributes {stable_mosaic.version = 11 : i64} {
  func.func @_fused_kernel(%arg0: memref<2x16xf32, #tpu.memory_space<vmem>>, %arg1: memref<16x64xf32, #tpu.memory_space<vmem>>, %arg2: memref<1x64xf32, #tpu.memory_space<vmem>>, %arg3: memref<1x64xf32, #tpu.memory_space<vmem>>, %arg4: memref<1x64xf32, #tpu.memory_space<vmem>>, %arg5: memref<64x128xf32, #tpu.memory_space<vmem>>, %arg6: memref<1x128xf32, #tpu.memory_space<vmem>>, %arg7: memref<1x128xf32, #tpu.memory_space<vmem>>, %arg8: memref<1x128xf32, #tpu.memory_space<vmem>>, %arg9: memref<128x256xf32, #tpu.memory_space<vmem>>, %arg10: memref<1x256xf32, #tpu.memory_space<vmem>>, %arg11: memref<1x256xf32, #tpu.memory_space<vmem>>, %arg12: memref<1x256xf32, #tpu.memory_space<vmem>>, %arg13: memref<256x1024xbf16, #tpu.memory_space<vmem>>, %arg14: memref<1x1024xf32, #tpu.memory_space<vmem>>, %arg15: memref<2x1024xf32, #tpu.memory_space<vmem>>) attributes {dimension_semantics = [], scalar_prefetch = 0 : i64, scratch_operands = 0 : i64, tpu.core_type = #tpu.core_type<tc>} {
    %c0 = arith.constant 0 : index
    %c0_0 = arith.constant 0 : index
    %0 = vector.load %arg0[%c0, %c0_0] : memref<2x16xf32, #tpu.memory_space<vmem>>, vector<2x16xf32>
    %c0_1 = arith.constant 0 : index
    %c0_2 = arith.constant 0 : index
    %1 = vector.load %arg1[%c0_1, %c0_2] : memref<16x64xf32, #tpu.memory_space<vmem>>, vector<16x64xf32>
    %cst = arith.constant dense<0.000000e+00> : vector<2x64xf32>
    %2 = tpu.matmul %0, %1, %cst {dimension_numbers = #tpu.dot_dimension_numbers<[1], [0], [0], [1], [0, 0, 1, 1], [], []>} : vector<2x16xf32>, vector<16x64xf32>, vector<2x64xf32> -> vector<2x64xf32>
    %c0_3 = arith.constant 0 : index
    %c0_4 = arith.constant 0 : index
    %3 = vector.load %arg2[%c0_3, %c0_4] : memref<1x64xf32, #tpu.memory_space<vmem>>, vector<1x64xf32>
    %4 = vector.broadcast %3 : vector<1x64xf32> to vector<2x64xf32>
    %5 = arith.addf %2, %4 : vector<2x64xf32>
    %cst_5 = arith.constant dense<0.000000e+00> : vector<64xf32>
    %6 = vector.multi_reduction <add>, %5, %cst_5 [0] : vector<2x64xf32> to vector<64xf32>
    %7 = vector.shape_cast %6 : vector<64xf32> to vector<1x64xf32>
    %cst_6 = arith.constant 2.000000e+00 : f32
    %8 = vector.broadcast %cst_6 : f32 to vector<1x64xf32>
    %9 = arith.divf %7, %8 : vector<1x64xf32>
    %10 = vector.broadcast %9 : vector<1x64xf32> to vector<2x64xf32>
    %11 = arith.subf %5, %10 : vector<2x64xf32>
    %12 = vector.broadcast %9 : vector<1x64xf32> to vector<2x64xf32>
    %13 = arith.subf %5, %12 : vector<2x64xf32>
    %14 = arith.mulf %11, %13 : vector<2x64xf32>
    %cst_7 = arith.constant dense<0.000000e+00> : vector<64xf32>
    %15 = vector.multi_reduction <add>, %14, %cst_7 [0] : vector<2x64xf32> to vector<64xf32>
    %16 = vector.shape_cast %15 : vector<64xf32> to vector<1x64xf32>
    %cst_8 = arith.constant 2.000000e+00 : f32
    %17 = vector.broadcast %cst_8 : f32 to vector<1x64xf32>
    %18 = arith.divf %16, %17 : vector<1x64xf32>
    %19 = vector.broadcast %9 : vector<1x64xf32> to vector<2x64xf32>
    %20 = arith.subf %5, %19 : vector<2x64xf32>
    %cst_9 = arith.constant 9.99999974E-6 : f32
    %21 = vector.broadcast %cst_9 : f32 to vector<1x64xf32>
    %22 = arith.addf %18, %21 : vector<1x64xf32>
    %23 = math.rsqrt %22 : vector<1x64xf32>
    %24 = vector.broadcast %23 : vector<1x64xf32> to vector<2x64xf32>
    %25 = arith.mulf %20, %24 : vector<2x64xf32>
    %c0_10 = arith.constant 0 : index
    %c0_11 = arith.constant 0 : index
    %26 = vector.load %arg3[%c0_10, %c0_11] : memref<1x64xf32, #tpu.memory_space<vmem>>, vector<1x64xf32>
    %27 = vector.broadcast %26 : vector<1x64xf32> to vector<2x64xf32>
    %28 = arith.mulf %25, %27 : vector<2x64xf32>
    %c0_12 = arith.constant 0 : index
    %c0_13 = arith.constant 0 : index
    %29 = vector.load %arg4[%c0_12, %c0_13] : memref<1x64xf32, #tpu.memory_space<vmem>>, vector<1x64xf32>
    %30 = vector.broadcast %29 : vector<1x64xf32> to vector<2x64xf32>
    %31 = arith.addf %28, %30 : vector<2x64xf32>
    %cst_14 = arith.constant 0.000000e+00 : f32
    %32 = vector.broadcast %cst_14 : f32 to vector<2x64xf32>
    %33 = arith.maximumf %31, %32 : vector<2x64xf32>
    %c0_15 = arith.constant 0 : index
    %c0_16 = arith.constant 0 : index
    %34 = vector.load %arg5[%c0_15, %c0_16] : memref<64x128xf32, #tpu.memory_space<vmem>>, vector<64x128xf32>
    %cst_17 = arith.constant dense<0.000000e+00> : vector<2x128xf32>
    %35 = tpu.matmul %33, %34, %cst_17 {dimension_numbers = #tpu.dot_dimension_numbers<[1], [0], [0], [1], [0, 0, 1, 1], [], []>} : vector<2x64xf32>, vector<64x128xf32>, vector<2x128xf32> -> vector<2x128xf32>
    %c0_18 = arith.constant 0 : index
    %c0_19 = arith.constant 0 : index
    %36 = vector.load %arg6[%c0_18, %c0_19] : memref<1x128xf32, #tpu.memory_space<vmem>>, vector<1x128xf32>
    %37 = vector.broadcast %36 : vector<1x128xf32> to vector<2x128xf32>
    %38 = arith.addf %35, %37 : vector<2x128xf32>
    %cst_20 = arith.constant dense<0.000000e+00> : vector<128xf32>
    %39 = vector.multi_reduction <add>, %38, %cst_20 [0] : vector<2x128xf32> to vector<128xf32>
    %40 = vector.shape_cast %39 : vector<128xf32> to vector<1x128xf32>
    %cst_21 = arith.constant 2.000000e+00 : f32
    %41 = vector.broadcast %cst_21 : f32 to vector<1x128xf32>
    %42 = arith.divf %40, %41 : vector<1x128xf32>
    %43 = vector.broadcast %42 : vector<1x128xf32> to vector<2x128xf32>
    %44 = arith.subf %38, %43 : vector<2x128xf32>
    %45 = vector.broadcast %42 : vector<1x128xf32> to vector<2x128xf32>
    %46 = arith.subf %38, %45 : vector<2x128xf32>
    %47 = arith.mulf %44, %46 : vector<2x128xf32>
    %cst_22 = arith.constant dense<0.000000e+00> : vector<128xf32>
    %48 = vector.multi_reduction <add>, %47, %cst_22 [0] : vector<2x128xf32> to vector<128xf32>
    %49 = vector.shape_cast %48 : vector<128xf32> to vector<1x128xf32>
    %cst_23 = arith.constant 2.000000e+00 : f32
    %50 = vector.broadcast %cst_23 : f32 to vector<1x128xf32>
    %51 = arith.divf %49, %50 : vector<1x128xf32>
    %52 = vector.broadcast %42 : vector<1x128xf32> to vector<2x128xf32>
    %53 = arith.subf %38, %52 : vector<2x128xf32>
    %cst_24 = arith.constant 9.99999974E-6 : f32
    %54 = vector.broadcast %cst_24 : f32 to vector<1x128xf32>
    %55 = arith.addf %51, %54 : vector<1x128xf32>
    %56 = math.rsqrt %55 : vector<1x128xf32>
    %57 = vector.broadcast %56 : vector<1x128xf32> to vector<2x128xf32>
    %58 = arith.mulf %53, %57 : vector<2x128xf32>
    %c0_25 = arith.constant 0 : index
    %c0_26 = arith.constant 0 : index
    %59 = vector.load %arg7[%c0_25, %c0_26] : memref<1x128xf32, #tpu.memory_space<vmem>>, vector<1x128xf32>
    %60 = vector.broadcast %59 : vector<1x128xf32> to vector<2x128xf32>
    %61 = arith.mulf %58, %60 : vector<2x128xf32>
    %c0_27 = arith.constant 0 : index
    %c0_28 = arith.constant 0 : index
    %62 = vector.load %arg8[%c0_27, %c0_28] : memref<1x128xf32, #tpu.memory_space<vmem>>, vector<1x128xf32>
    %63 = vector.broadcast %62 : vector<1x128xf32> to vector<2x128xf32>
    %64 = arith.addf %61, %63 : vector<2x128xf32>
    %cst_29 = arith.constant 0.000000e+00 : f32
    %65 = vector.broadcast %cst_29 : f32 to vector<2x128xf32>
    %66 = arith.maximumf %64, %65 : vector<2x128xf32>
    %c0_30 = arith.constant 0 : index
    %c0_31 = arith.constant 0 : index
    %67 = vector.load %arg9[%c0_30, %c0_31] : memref<128x256xf32, #tpu.memory_space<vmem>>, vector<128x256xf32>
    %cst_32 = arith.constant dense<0.000000e+00> : vector<2x256xf32>
    %68 = tpu.matmul %66, %67, %cst_32 {dimension_numbers = #tpu.dot_dimension_numbers<[1], [0], [0], [1], [0, 0, 1, 1], [], []>} : vector<2x128xf32>, vector<128x256xf32>, vector<2x256xf32> -> vector<2x256xf32>
    %c0_33 = arith.constant 0 : index
    %c0_34 = arith.constant 0 : index
    %69 = vector.load %arg10[%c0_33, %c0_34] : memref<1x256xf32, #tpu.memory_space<vmem>>, vector<1x256xf32>
    %70 = vector.broadcast %69 : vector<1x256xf32> to vector<2x256xf32>
    %71 = arith.addf %68, %70 : vector<2x256xf32>
    %cst_35 = arith.constant dense<0.000000e+00> : vector<256xf32>
    %72 = vector.multi_reduction <add>, %71, %cst_35 [0] : vector<2x256xf32> to vector<256xf32>
    %73 = vector.shape_cast %72 : vector<256xf32> to vector<1x256xf32>
    %cst_36 = arith.constant 2.000000e+00 : f32
    %74 = vector.broadcast %cst_36 : f32 to vector<1x256xf32>
    %75 = arith.divf %73, %74 : vector<1x256xf32>
    %76 = vector.broadcast %75 : vector<1x256xf32> to vector<2x256xf32>
    %77 = arith.subf %71, %76 : vector<2x256xf32>
    %78 = vector.broadcast %75 : vector<1x256xf32> to vector<2x256xf32>
    %79 = arith.subf %71, %78 : vector<2x256xf32>
    %80 = arith.mulf %77, %79 : vector<2x256xf32>
    %cst_37 = arith.constant dense<0.000000e+00> : vector<256xf32>
    %81 = vector.multi_reduction <add>, %80, %cst_37 [0] : vector<2x256xf32> to vector<256xf32>
    %82 = vector.shape_cast %81 : vector<256xf32> to vector<1x256xf32>
    %cst_38 = arith.constant 2.000000e+00 : f32
    %83 = vector.broadcast %cst_38 : f32 to vector<1x256xf32>
    %84 = arith.divf %82, %83 : vector<1x256xf32>
    %85 = vector.broadcast %75 : vector<1x256xf32> to vector<2x256xf32>
    %86 = arith.subf %71, %85 : vector<2x256xf32>
    %cst_39 = arith.constant 9.99999974E-6 : f32
    %87 = vector.broadcast %cst_39 : f32 to vector<1x256xf32>
    %88 = arith.addf %84, %87 : vector<1x256xf32>
    %89 = math.rsqrt %88 : vector<1x256xf32>
    %90 = vector.broadcast %89 : vector<1x256xf32> to vector<2x256xf32>
    %91 = arith.mulf %86, %90 : vector<2x256xf32>
    %c0_40 = arith.constant 0 : index
    %c0_41 = arith.constant 0 : index
    %92 = vector.load %arg11[%c0_40, %c0_41] : memref<1x256xf32, #tpu.memory_space<vmem>>, vector<1x256xf32>
    %93 = vector.broadcast %92 : vector<1x256xf32> to vector<2x256xf32>
    %94 = arith.mulf %91, %93 : vector<2x256xf32>
    %c0_42 = arith.constant 0 : index
    %c0_43 = arith.constant 0 : index
    %95 = vector.load %arg12[%c0_42, %c0_43] : memref<1x256xf32, #tpu.memory_space<vmem>>, vector<1x256xf32>
    %96 = vector.broadcast %95 : vector<1x256xf32> to vector<2x256xf32>
    %97 = arith.addf %94, %96 : vector<2x256xf32>
    %cst_44 = arith.constant 0.000000e+00 : f32
    %98 = vector.broadcast %cst_44 : f32 to vector<2x256xf32>
    %99 = arith.maximumf %97, %98 : vector<2x256xf32>
    %100 = arith.truncf %99 : vector<2x256xf32> to vector<2x256xbf16>
    %c0_45 = arith.constant 0 : index
    %c0_46 = arith.constant 0 : index
    %101 = vector.load %arg13[%c0_45, %c0_46] : memref<256x1024xbf16, #tpu.memory_space<vmem>>, vector<256x1024xbf16>
    %cst_47 = arith.constant dense<0.000000e+00> : vector<2x1024xf32>
    %102 = tpu.matmul %100, %101, %cst_47 {dimension_numbers = #tpu.dot_dimension_numbers<[1], [0], [0], [1], [0, 0, 1, 1], [], []>} : vector<2x256xbf16>, vector<256x1024xbf16>, vector<2x1024xf32> -> vector<2x1024xf32>
    %c0_48 = arith.constant 0 : index
    %c0_49 = arith.constant 0 : index
    %103 = vector.load %arg14[%c0_48, %c0_49] : memref<1x1024xf32, #tpu.memory_space<vmem>>, vector<1x1024xf32>
    %104 = vector.broadcast %103 : vector<1x1024xf32> to vector<2x1024xf32>
    %105 = arith.addf %102, %104 : vector<2x1024xf32>
    %cst_50 = arith.constant 5.000000e-01 : f32
    %106 = vector.broadcast %cst_50 : f32 to vector<2x1024xf32>
    %107 = arith.mulf %106, %105 : vector<2x1024xf32>
    %108 = math.tanh %107 : vector<2x1024xf32>
    %cst_51 = arith.constant 5.000000e-01 : f32
    %109 = vector.broadcast %cst_51 : f32 to vector<2x1024xf32>
    %110 = arith.mulf %109, %108 : vector<2x1024xf32>
    %cst_52 = arith.constant 5.000000e-01 : f32
    %111 = vector.broadcast %cst_52 : f32 to vector<2x1024xf32>
    %112 = arith.addf %110, %111 : vector<2x1024xf32>
    %c0_53 = arith.constant 0 : index
    %c0_54 = arith.constant 0 : index
    %113 = vector.load %arg15[%c0_53, %c0_54] : memref<2x1024xf32, #tpu.memory_space<vmem>>, vector<2x1024xf32>
    tpu.vector_store %arg15[%c0_53, %c0_54], %112 {strides = array<i32>} : memref<2x1024xf32, #tpu.memory_space<vmem>>, vector<2x1024xf32>,
    return
  }
}

</mosaic_0001>

<llo_original>
// kernel: decoder_forward.1
$region0: #{decoder_forward.1}
  #allocation0 [shape = 'u32[]', space=smem, size = 0x4, offset = 0x4, fixed_abs, tag = 'smem constant byte address 0x4 - core index']
  #allocation1 [shape = 'u32[144,128]{1,0:T(1,128)}', space=vmem, size = 0x12000, scoped, tag = 'internal scratch']
  %s0 = inlined_call_operand.vmem [shape: f32[2,16], index: 0, kind: input, shape index: {}]
  %s1 = inlined_call_operand.vmem [shape: f32[16,64], index: 1, kind: input, shape index: {}]
  %s2 = inlined_call_operand.vmem [shape: f32[1,64], index: 2, kind: input, shape index: {}]
  %s3 = inlined_call_operand.vmem [shape: f32[1,64], index: 3, kind: input, shape index: {}]
  %s4 = inlined_call_operand.vmem [shape: f32[1,64], index: 4, kind: input, shape index: {}]
  %s5 = inlined_call_operand.vmem [shape: f32[64,128], index: 5, kind: input, shape index: {}]
  %s6 = inlined_call_operand.vmem [shape: f32[1,128], index: 6, kind: input, shape index: {}]
  %s7 = inlined_call_operand.vmem [shape: f32[1,128], index: 7, kind: input, shape index: {}]
  %s8 = inlined_call_operand.vmem [shape: f32[1,128], index: 8, kind: input, shape index: {}]
  %s9 = inlined_call_operand.vmem [shape: f32[128,256], index: 9, kind: input, shape index: {}]
  %s10 = inlined_call_operand.vmem [shape: f32[1,256], index: 10, kind: input, shape index: {}]
  %s11 = inlined_call_operand.vmem [shape: f32[1,256], index: 11, kind: input, shape index: {}]
  %s12 = inlined_call_operand.vmem [shape: f32[1,256], index: 12, kind: input, shape index: {}]
  %s13 = inlined_call_operand.vmem [shape: bf16[256,1024], index: 13, kind: input, shape index: {}]
  %s14 = inlined_call_operand.vmem [shape: f32[1,1024], index: 14, kind: input, shape index: {}]
  %s15 = inlined_call_operand.vmem [shape: f32[2,1024], index: 15, kind: output, shape index: {}]
  %s16 = sld [smem:[#allocation0]]
  $region70: #{decoder_forward.1} parent=0
    _
  %s18 = ssub.s32 1, %s16
  %s19 = scalar_select 0, %s18, %s16
  // Predicated region
  $region2: #{decoder_forward.1} parent=0 // pred_check
    _
  $region3: #{decoder_forward.1} parent=0 // pred_check_branch
    %21 = sbr.rel (0) target = $region5
  $region4: #{decoder_forward.1} parent=0 // pred_region
    _
  $region5: #{decoder_forward.1} parent=0 // pred_fallthru
    _
  // Predicated region
  $region6: #{decoder_forward.1} parent=0 // pred_check
    _
  $region7: #{decoder_forward.1} parent=0 // pred_check_branch
    %23 = sbr.rel (0) target = $region9
  $region8: #{decoder_forward.1} parent=0 // pred_region
    _
  $region9: #{decoder_forward.1} parent=0 // pred_fallthru
    _
  // Predicated region
  $region10: #{decoder_forward.1} parent=0 // pred_check
    _
  $region11: #{decoder_forward.1} parent=0 // pred_check_branch
    %25 = sbr.rel (0) target = $region13
  $region12: #{decoder_forward.1} parent=0 // pred_region
    _
  $region13: #{decoder_forward.1} parent=0 // pred_fallthru
    _
  // Predicated region
  $region14: #{decoder_forward.1} parent=0 // pred_check
    _
  $region15: #{decoder_forward.1} parent=0 // pred_check_branch
    %27 = sbr.rel (0) target = $region17
  $region16: #{decoder_forward.1} parent=0 // pred_region
    _
  $region17: #{decoder_forward.1} parent=0 // pred_fallthru
    _
  // Predicated region
  $region18: #{decoder_forward.1} parent=0 // pred_check
    _
  $region19: #{decoder_forward.1} parent=0 // pred_check_branch
    %29 = sbr.rel (0) target = $region21
  $region20: #{decoder_forward.1} parent=0 // pred_region
    _
  $region21: #{decoder_forward.1} parent=0 // pred_fallthru
    _
  // Predicated region
  $region22: #{decoder_forward.1} parent=0 // pred_check
    _
  $region23: #{decoder_forward.1} parent=0 // pred_check_branch
    %31 = sbr.rel (0) target = $region25
  $region24: #{decoder_forward.1} parent=0 // pred_region
    _
  $region25: #{decoder_forward.1} parent=0 // pred_fallthru
    _
  // Predicated region
  $region26: #{decoder_forward.1} parent=0 // pred_check
    _
  $region27: #{decoder_forward.1} parent=0 // pred_check_branch
    %33 = sbr.rel (0) target = $region29
  $region28: #{decoder_forward.1} parent=0 // pred_region
    _
  $region29: #{decoder_forward.1} parent=0 // pred_fallthru
    _
  // Predicated region
  $region30: #{decoder_forward.1} parent=0 // pred_check
    _
  $region31: #{decoder_forward.1} parent=0 // pred_check_branch
    %35 = sbr.rel (0) target = $region33
  $region32: #{decoder_forward.1} parent=0 // pred_region
    _
  $region33: #{decoder_forward.1} parent=0 // pred_fallthru
    _
  // Predicated region
  $region34: #{decoder_forward.1} parent=0 // pred_check
    _
  $region35: #{decoder_forward.1} parent=0 // pred_check_branch
    %37 = sbr.rel (0) target = $region37
  $region36: #{decoder_forward.1} parent=0 // pred_region
    _
  $region37: #{decoder_forward.1} parent=0 // pred_fallthru
    _
  // Predicated region
  $region38: #{decoder_forward.1} parent=0 // pred_check
    _
  $region39: #{decoder_forward.1} parent=0 // pred_check_branch
    %39 = sbr.rel (0) target = $region41
  $region40: #{decoder_forward.1} parent=0 // pred_region
    _
  $region41: #{decoder_forward.1} parent=0 // pred_fallthru
    _
  // Predicated region
  $region42: #{decoder_forward.1} parent=0 // pred_check
    _
  $region43: #{decoder_forward.1} parent=0 // pred_check_branch
    %41 = sbr.rel (0) target = $region45
  $region44: #{decoder_forward.1} parent=0 // pred_region
    _
  $region45: #{decoder_forward.1} parent=0 // pred_fallthru
    _
  // Predicated region
  $region46: #{decoder_forward.1} parent=0 // pred_check
    _
  $region47: #{decoder_forward.1} parent=0 // pred_check_branch
    %43 = sbr.rel (0) target = $region49
  $region48: #{decoder_forward.1} parent=0 // pred_region
    _
  $region49: #{decoder_forward.1} parent=0 // pred_fallthru
    _
  // Predicated region
  $region50: #{decoder_forward.1} parent=0 // pred_check
    _
  $region51: #{decoder_forward.1} parent=0 // pred_check_branch
    %45 = sbr.rel (0) target = $region53
  $region52: #{decoder_forward.1} parent=0 // pred_region
    _
  $region53: #{decoder_forward.1} parent=0 // pred_fallthru
    _
  // Predicated region
  $region54: #{decoder_forward.1} parent=0 // pred_check
    _
  $region55: #{decoder_forward.1} parent=0 // pred_check_branch
    %47 = sbr.rel (0) target = $region57
  $region56: #{decoder_forward.1} parent=0 // pred_region
    _
  $region57: #{decoder_forward.1} parent=0 // pred_fallthru
    _
  // Predicated region
  $region58: #{decoder_forward.1} parent=0 // pred_check
    _
  $region59: #{decoder_forward.1} parent=0 // pred_check_branch
    %49 = sbr.rel (0) target = $region61
  $region60: #{decoder_forward.1} parent=0 // pred_region
    _
  $region61: #{decoder_forward.1} parent=0 // pred_fallthru
    _
  %v50 = vld [vmem:[%s0] sm:$0x3]
  %v51 = vld [vmem:[%s1] sm:$0xff]
  %v52 = vld [vmem:[%s1 + $0x8] sm:$0xff]
  %v53 = vld [vmem:[%s2] sm:$0x1]
  %v55 = vlaneseq
  %v56 = vshrl.u32 %v55, 7
  %v57 = vsub.s32 0, %v56
  %v58 = vrot.slane %v53, %v57
  %vm60 = vcmask 130048
  %v62 = vsel %vm60, %v50, 0
  %64 = vmatprep.subr.mxu0 0.0
  %65 = vmatpush1.msra.mxu0 %v51
  %66 = vmatprep.subr.mxu0 0.0
  %67 = vmatpush1.msra.mxu0 %v52
  %68 = vmatprep.subr.mxu0 0.0
  %69 = vmatpush1.msra.mxu0 0.0
  %70 = vmatprep.subr.mxu0 0.0
  %71 = vmatpush1.msra.mxu0 0.0
  %72 = vmatprep.subr.mxu0 0.0
  %73 = vmatpush1.msra.mxu0 0.0
  %74 = vmatprep.subr.mxu0 0.0
  %75 = vmatpush1.msra.mxu0 0.0
  %76 = vmatprep.subr.mxu0 0.0
  %77 = vmatpush1.msra.mxu0 0.0
  %78 = vmatprep.subr.mxu0 0.0
  %79 = vmatpush1.msra.mxu0 0.0
  %80 = vmatprep.subr.mxu0 0.0
  %81 = vmatpush1.msra.mxu0 0.0
  %82 = vmatprep.subr.mxu0 0.0
  %83 = vmatpush1.msra.mxu0 0.0
  %84 = vmatprep.subr.mxu0 0.0
  %85 = vmatpush1.msra.mxu0 0.0
  %86 = vmatprep.subr.mxu0 0.0
  %87 = vmatpush1.msra.mxu0 0.0
  %88 = vmatprep.subr.mxu0 0.0
  %89 = vmatpush1.msra.mxu0 0.0
  %90 = vmatprep.subr.mxu0 0.0
  %91 = vmatpush1.msra.mxu0 0.0
  %92 = vmatprep.subr.mxu0 0.0
  %93 = vmatpush1.msra.mxu0 0.0
  %94 = vmatprep.subr.mxu0 0.0
  %95 = vmatpush1.msra.mxu0 0.0
  %96 = vmatprep.subr.mxu0 0.0
  %97 = vmatpush1.msra.mxu0 0.0
  %98 = vmatprep.subr.mxu0 0.0
  %99 = vmatpush1.msra.mxu0 0.0
  %100 = vmatprep.subr.mxu0 0.0
  %101 = vmatpush1.msra.mxu0 0.0
  %102 = vmatprep.subr.mxu0 0.0
  %103 = vmatpush1.msra.mxu0 0.0
  %104 = vmatprep.subr.mxu0 0.0
  %105 = vmatpush1.msra.mxu0 0.0
  %106 = vmatprep.subr.mxu0 0.0
  %107 = vmatpush1.msra.mxu0 0.0
  %108 = vmatprep.subr.mxu0 0.0
  %109 = vmatpush1.msra.mxu0 0.0
  %110 = vmatprep.subr.mxu0 0.0
  %111 = vmatpush1.msra.mxu0 0.0
  %112 = vmatprep.subr.mxu0 0.0
  %113 = vmatpush1.msra.mxu0 0.0
  %114 = vmatprep.subr.mxu0 0.0
  %115 = vmatpush1.msra.mxu0 0.0
  %116 = vmatprep.subr.mxu0 0.0
  %117 = vmatpush1.msra.mxu0 0.0
  %118 = vmatprep.subr.mxu0 0.0
  %119 = vmatpush1.msra.mxu0 0.0
  %120 = vmatprep.subr.mxu0 0.0
  %121 = vmatpush1.msra.mxu0 0.0
  %122 = vmatprep.subr.mxu0 0.0
  %123 = vmatpush1.msra.mxu0 0.0
  %124 = vmatprep.subr.mxu0 0.0
  %125 = vmatpush1.msra.mxu0 0.0
  %126 = vmatprep.subr.mxu0 0.0
  %127 = vmatpush1.msra.mxu0 0.0
  %128 = vmatprep.mubr.f32.mxu0 0.0
  %129 = vmatmul.mubr.f32.gmra.mrb[0].mxu0 %v62
  %v130 = vpop.f32.mrb[0].mxu0
  %v131 = vadd.f32 %v58, %v130
  %v132 = vpop.f32.mrb[0].mxu0
  %133 = vdwg.mxu0
  %vm134 = vcmask 517120
  %v135 = vsel %vm134, %v131, 0.0
  %v136 = vrot.slane %v135, 4
  %v137 = vadd.f32 %v135, %v136
  %v138 = vrot.slane %v137, 2
  %v139 = vadd.f32 %v137, %v138
  %v140 = vrot.slane %v139, 1
  %v141 = vadd.f32 %v139, %v140
  %v142 = vrcp.pop 2.0
  %v143 = vmul.f32 %v141, %v142
  %v144 = vsub.f32 %v131, %v143
  %v145 = vmul.f32 %v144, %v144
  %v146 = vsel %vm134, %v145, 0.0
  %v147 = vrot.slane %v146, 4
  %v148 = vadd.f32 %v146, %v147
  %v149 = vrot.slane %v148, 2
  %v150 = vadd.f32 %v148, %v149
  %v151 = vrot.slane %v150, 1
  %v152 = vadd.f32 %v150, %v151
  %v153 = vmul.f32 %v152, %v142
  %v154 = vadd.f32 %v153, 1e-05
  %v155 = vrsqrt.pop %v154
  %v156 = vmul.f32 %v144, %v155
  %v157 = vld [vmem:[%s3] sm:$0x1]
  %v159 = vlaneseq
  %v160 = vshrl.u32 %v159, 7
  %v161 = vsub.s32 0, %v160
  %v162 = vrot.slane %v157, %v161
  %v164 = vmul.f32 %v156, %v162
  %v165 = vld [vmem:[%s4] sm:$0x1]
  %v167 = vlaneseq
  %v168 = vshrl.u32 %v167, 7
  %v169 = vsub.s32 0, %v168
  %v170 = vrot.slane %v165, %v169
  %v172 = vadd.f32 %v164, %v170
  %v173 = vmax.f32 %v172, 0.0
  %v174 = vld [vmem:[%s5] sm:$0xff]
  %v175 = vld [vmem:[%s5 + $0x8] sm:$0xff]
  %v176 = vld [vmem:[%s5 + $0x10] sm:$0xff]
  %v177 = vld [vmem:[%s5 + $0x18] sm:$0xff]
  %v178 = vld [vmem:[%s5 + $0x20] sm:$0xff]
  %v179 = vld [vmem:[%s5 + $0x28] sm:$0xff]
  %v180 = vld [vmem:[%s5 + $0x30] sm:$0xff]
  %v181 = vld [vmem:[%s5 + $0x38] sm:$0xff]
  %v182 = vld [vmem:[%s6] sm:$0x1]
  %v184 = vlaneseq
  %v185 = vshrl.u32 %v184, 7
  %v186 = vsub.s32 0, %v185
  %v187 = vrot.slane %v182, %v186
  %vm189 = vcmask 523264
  %v191 = vsel %vm189, %v173, 0
  %193 = vmatprep.subr.mxu0 0.0
  %194 = vmatpush1.msra.mxu0 %v174
  %195 = vmatprep.subr.mxu0 0.0
  %196 = vmatpush1.msra.mxu0 %v175
  %197 = vmatprep.subr.mxu0 0.0
  %198 = vmatpush1.msra.mxu0 %v176
  %199 = vmatprep.subr.mxu0 0.0
  %200 = vmatpush1.msra.mxu0 %v177
  %201 = vmatprep.subr.mxu0 0.0
  %202 = vmatpush1.msra.mxu0 %v178
  %203 = vmatprep.subr.mxu0 0.0
  %204 = vmatpush1.msra.mxu0 %v179
  %205 = vmatprep.subr.mxu0 0.0
  %206 = vmatpush1.msra.mxu0 %v180
  %207 = vmatprep.subr.mxu0 0.0
  %208 = vmatpush1.msra.mxu0 %v181
  %209 = vmatprep.subr.mxu0 0.0
  %210 = vmatpush1.msra.mxu0 0.0
  %211 = vmatprep.subr.mxu0 0.0
  %212 = vmatpush1.msra.mxu0 0.0
  %213 = vmatprep.subr.mxu0 0.0
  %214 = vmatpush1.msra.mxu0 0.0
  %215 = vmatprep.subr.mxu0 0.0
  %216 = vmatpush1.msra.mxu0 0.0
  %217 = vmatprep.subr.mxu0 0.0
  %218 = vmatpush1.msra.mxu0 0.0
  %219 = vmatprep.subr.mxu0 0.0
  %220 = vmatpush1.msra.mxu0 0.0
  %221 = vmatprep.subr.mxu0 0.0
  %222 = vmatpush1.msra.mxu0 0.0
  %223 = vmatprep.subr.mxu0 0.0
  %224 = vmatpush1.msra.mxu0 0.0
  %225 = vmatprep.subr.mxu0 0.0
  %226 = vmatpush1.msra.mxu0 0.0
  %227 = vmatprep.subr.mxu0 0.0
  %228 = vmatpush1.msra.mxu0 0.0
  %229 = vmatprep.subr.mxu0 0.0
  %230 = vmatpush1.msra.mxu0 0.0
  %231 = vmatprep.subr.mxu0 0.0
  %232 = vmatpush1.msra.mxu0 0.0
  %233 = vmatprep.subr.mxu0 0.0
  %234 = vmatpush1.msra.mxu0 0.0
  %235 = vmatprep.subr.mxu0 0.0
  %236 = vmatpush1.msra.mxu0 0.0
  %237 = vmatprep.subr.mxu0 0.0
  %238 = vmatpush1.msra.mxu0 0.0
  %239 = vmatprep.subr.mxu0 0.0
  %240 = vmatpush1.msra.mxu0 0.0
  %241 = vmatprep.subr.mxu0 0.0
  %242 = vmatpush1.msra.mxu0 0.0
  %243 = vmatprep.subr.mxu0 0.0
  %244 = vmatpush1.msra.mxu0 0.0
  %245 = vmatprep.subr.mxu0 0.0
  %246 = vmatpush1.msra.mxu0 0.0
  %247 = vmatprep.subr.mxu0 0.0
  %248 = vmatpush1.msra.mxu0 0.0
  %249 = vmatprep.subr.mxu0 0.0
  %250 = vmatpush1.msra.mxu0 0.0
  %251 = vmatprep.subr.mxu0 0.0
  %252 = vmatpush1.msra.mxu0 0.0
  %253 = vmatprep.subr.mxu0 0.0
  %254 = vmatpush1.msra.mxu0 0.0
  %255 = vmatprep.subr.mxu0 0.0
  %256 = vmatpush1.msra.mxu0 0.0
  %257 = vmatprep.mubr.f32.mxu0 0.0
  %258 = vmatmul.mubr.f32.gmra.mrb[0].mxu0 %v191
  %v259 = vpop.f32.mrb[0].mxu0
  %v260 = vadd.f32 %v187, %v259
  %v261 = vpop.f32.mrb[0].mxu0
  %262 = vdwg.mxu0
  %vm263 = vcmask 1041408
  %v264 = vsel %vm263, %v260, 0.0
  %v265 = vrot.slane %v264, 4
  %v266 = vadd.f32 %v264, %v265
  %v267 = vrot.slane %v266, 2
  %v268 = vadd.f32 %v266, %v267
  %v269 = vrot.slane %v268, 1
  %v270 = vadd.f32 %v268, %v269
  %v271 = vmul.f32 %v270, %v142
  %v272 = vsub.f32 %v260, %v271
  %v273 = vmul.f32 %v272, %v272
  %v274 = vsel %vm263, %v273, 0.0
  %v275 = vrot.slane %v274, 4
  %v276 = vadd.f32 %v274, %v275
  %v277 = vrot.slane %v276, 2
  %v278 = vadd.f32 %v276, %v277
  %v279 = vrot.slane %v278, 1
  %v280 = vadd.f32 %v278, %v279
  %v281 = vmul.f32 %v280, %v142
  %v282 = vadd.f32 %v281, 1e-05
  %v283 = vrsqrt.pop %v282
  %v284 = vmul.f32 %v272, %v283
  %v285 = vld [vmem:[%s7] sm:$0x1]
  %v287 = vlaneseq
  %v288 = vshrl.u32 %v287, 7
  %v289 = vsub.s32 0, %v288
  %v290 = vrot.slane %v285, %v289
  %v292 = vmul.f32 %v284, %v290
  %v293 = vld [vmem:[%s8] sm:$0x1]
  %v295 = vlaneseq
  %v296 = vshrl.u32 %v295, 7
  %v297 = vsub.s32 0, %v296
  %v298 = vrot.slane %v293, %v297
  %v300 = vadd.f32 %v292, %v298
  %v301 = vmax.f32 %v300, 0.0
  %v302 = vld [vmem:[%s9] sm:$0xff]
  %v303 = vld [vmem:[%s9 + $0x8] sm:$0xff]
  %v304 = vld [vmem:[%s9 + $0x10] sm:$0xff]
  %v305 = vld [vmem:[%s9 + $0x18] sm:$0xff]
  %v306 = vld [vmem:[%s9 + $0x20] sm:$0xff]
  %v307 = vld [vmem:[%s9 + $0x28] sm:$0xff]
  %v308 = vld [vmem:[%s9 + $0x30] sm:$0xff]
  %v309 = vld [vmem:[%s9 + $0x38] sm:$0xff]
  %v310 = vld [vmem:[%s9 + $0x40] sm:$0xff]
  %v311 = vld [vmem:[%s9 + $0x48] sm:$0xff]
  %v312 = vld [vmem:[%s9 + $0x50] sm:$0xff]
  %v313 = vld [vmem:[%s9 + $0x58] sm:$0xff]
  %v314 = vld [vmem:[%s9 + $0x60] sm:$0xff]
  %v315 = vld [vmem:[%s9 + $0x68] sm:$0xff]
  %v316 = vld [vmem:[%s9 + $0x70] sm:$0xff]
  %v317 = vld [vmem:[%s9 + $0x78] sm:$0xff]
  %v318 = vld [vmem:[%s9 + $0x80] sm:$0xff]
  %v319 = vld [vmem:[%s9 + $0x88] sm:$0xff]
  %v320 = vld [vmem:[%s9 + $0x90] sm:$0xff]
  %v321 = vld [vmem:[%s9 + $0x98] sm:$0xff]
  %v322 = vld [vmem:[%s9 + $0xa0] sm:$0xff]
  %v323 = vld [vmem:[%s9 + $0xa8] sm:$0xff]
  %v324 = vld [vmem:[%s9 + $0xb0] sm:$0xff]
  %v325 = vld [vmem:[%s9 + $0xb8] sm:$0xff]
  %v326 = vld [vmem:[%s9 + $0xc0] sm:$0xff]
  %v327 = vld [vmem:[%s9 + $0xc8] sm:$0xff]
  %v328 = vld [vmem:[%s9 + $0xd0] sm:$0xff]
  %v329 = vld [vmem:[%s9 + $0xd8] sm:$0xff]
  %v330 = vld [vmem:[%s9 + $0xe0] sm:$0xff]
  %v331 = vld [vmem:[%s9 + $0xe8] sm:$0xff]
  %v332 = vld [vmem:[%s9 + $0xf0] sm:$0xff]
  %v333 = vld [vmem:[%s9 + $0xf8] sm:$0xff]
  %v334 = vld [vmem:[%s10] sm:$0x3]
  %v336 = vlaneseq
  %v337 = vshrl.u32 %v336, 7
  %v338 = vsub.s32 0, %v337
  %v339 = vrot.slane %v334, %v338
  %v340 = vlaneseq
  %v341 = vshrl.u32 %v340, 7
  %v342 = vsub.s32 1, %v341
  %v343 = vrot.slane %v334, %v342
  %346 = vmatprep.subr.mxu0 %v303
  %347 = vmatpush1.msra.mxu0 %v302
  %348 = vmatprep.subr.mxu0 %v305
  %349 = vmatpush1.msra.mxu0 %v304
  %350 = vmatprep.subr.mxu0 %v307
  %351 = vmatpush1.msra.mxu0 %v306
  %352 = vmatprep.subr.mxu0 %v309
  %353 = vmatpush1.msra.mxu0 %v308
  %354 = vmatprep.subr.mxu0 %v311
  %355 = vmatpush1.msra.mxu0 %v310
  %356 = vmatprep.subr.mxu0 %v313
  %357 = vmatpush1.msra.mxu0 %v312
  %358 = vmatprep.subr.mxu0 %v315
  %359 = vmatpush1.msra.mxu0 %v314
  %360 = vmatprep.subr.mxu0 %v317
  %361 = vmatpush1.msra.mxu0 %v316
  %362 = vmatprep.subr.mxu0 %v319
  %363 = vmatpush1.msra.mxu0 %v318
  %364 = vmatprep.subr.mxu0 %v321
  %365 = vmatpush1.msra.mxu0 %v320
  %366 = vmatprep.subr.mxu0 %v323
  %367 = vmatpush1.msra.mxu0 %v322
  %368 = vmatprep.subr.mxu0 %v325
  %369 = vmatpush1.msra.mxu0 %v324
  %370 = vmatprep.subr.mxu0 %v327
  %371 = vmatpush1.msra.mxu0 %v326
  %372 = vmatprep.subr.mxu0 %v329
  %373 = vmatpush1.msra.mxu0 %v328
  %374 = vmatprep.subr.mxu0 %v331
  %375 = vmatpush1.msra.mxu0 %v330
  %376 = vmatprep.subr.mxu0 %v333
  %377 = vmatpush1.msra.mxu0 %v332
  %378 = vmatprep.subr.mxu0 0.0
  %379 = vmatpush1.msra.mxu0 0.0
  %380 = vmatprep.subr.mxu0 0.0
  %381 = vmatpush1.msra.mxu0 0.0
  %382 = vmatprep.subr.mxu0 0.0
  %383 = vmatpush1.msra.mxu0 0.0
  %384 = vmatprep.subr.mxu0 0.0
  %385 = vmatpush1.msra.mxu0 0.0
  %386 = vmatprep.subr.mxu0 0.0
  %387 = vmatpush1.msra.mxu0 0.0
  %388 = vmatprep.subr.mxu0 0.0
  %389 = vmatpush1.msra.mxu0 0.0
  %390 = vmatprep.subr.mxu0 0.0
  %391 = vmatpush1.msra.mxu0 0.0
  %392 = vmatprep.subr.mxu0 0.0
  %393 = vmatpush1.msra.mxu0 0.0
  %394 = vmatprep.subr.mxu0 0.0
  %395 = vmatpush1.msra.mxu0 0.0
  %396 = vmatprep.subr.mxu0 0.0
  %397 = vmatpush1.msra.mxu0 0.0
  %398 = vmatprep.subr.mxu0 0.0
  %399 = vmatpush1.msra.mxu0 0.0
  %400 = vmatprep.subr.mxu0 0.0
  %401 = vmatpush1.msra.mxu0 0.0
  %402 = vmatprep.subr.mxu0 0.0
  %403 = vmatpush1.msra.mxu0 0.0
  %404 = vmatprep.subr.mxu0 0.0
  %405 = vmatpush1.msra.mxu0 0.0
  %406 = vmatprep.subr.mxu0 0.0
  %407 = vmatpush1.msra.mxu0 0.0
  %408 = vmatprep.subr.mxu0 0.0
  %409 = vmatpush1.msra.mxu0 0.0
  %410 = vmatprep.mubr.f32.mxu0 0.0
  %411 = vmatmul.mubr.f32.gmra.mrb[0].mxu0 %v301
  %v412 = vpop.f32.mrb[0].mxu0
  %v413 = vadd.f32 %v339, %v412
  %v414 = vpop.f32.mrb[0].mxu0
  %v415 = vadd.f32 %v343, %v414
  %416 = vdwg.mxu0
  %v417 = vsel %vm263, %v413, 0.0
  %v418 = vrot.slane %v417, 4
  %v419 = vadd.f32 %v417, %v418
  %v420 = vrot.slane %v419, 2
  %v421 = vadd.f32 %v419, %v420
  %v422 = vrot.slane %v421, 1
  %v423 = vadd.f32 %v421, %v422
  %v424 = vsel %vm263, %v415, 0.0
  %v425 = vrot.slane %v424, 4
  %v426 = vadd.f32 %v424, %v425
  %v427 = vrot.slane %v426, 2
  %v428 = vadd.f32 %v426, %v427
  %v429 = vrot.slane %v428, 1
  %v430 = vadd.f32 %v428, %v429
  %v431 = vmul.f32 %v423, %v142
  %v432 = vmul.f32 %v430, %v142
  %v433 = vsub.f32 %v413, %v431
  %v434 = vsub.f32 %v415, %v432
  %v435 = vmul.f32 %v433, %v433
  %v436 = vmul.f32 %v434, %v434
  %v437 = vsel %vm263, %v435, 0.0
  %v438 = vrot.slane %v437, 4
  %v439 = vadd.f32 %v437, %v438
  %v440 = vrot.slane %v439, 2
  %v441 = vadd.f32 %v439, %v440
  %v442 = vrot.slane %v441, 1
  %v443 = vadd.f32 %v441, %v442
  %v444 = vsel %vm263, %v436, 0.0
  %v445 = vrot.slane %v444, 4
  %v446 = vadd.f32 %v444, %v445
  %v447 = vrot.slane %v446, 2
  %v448 = vadd.f32 %v446, %v447
  %v449 = vrot.slane %v448, 1
  %v450 = vadd.f32 %v448, %v449
  %v451 = vmul.f32 %v443, %v142
  %v452 = vmul.f32 %v450, %v142
  %v453 = vadd.f32 %v451, 1e-05
  %v454 = vadd.f32 %v452, 1e-05
  %v455 = vrsqrt.pop %v453
  %v456 = vrsqrt.pop %v454
  %v457 = vmul.f32 %v433, %v455
  %v458 = vmul.f32 %v434, %v456
  %v459 = vld [vmem:[%s11] sm:$0x3]
  %v461 = vlaneseq
  %v462 = vshrl.u32 %v461, 7
  %v463 = vsub.s32 0, %v462
  %v464 = vrot.slane %v459, %v463
  %v465 = vlaneseq
  %v466 = vshrl.u32 %v465, 7
  %v467 = vsub.s32 1, %v466
  %v468 = vrot.slane %v459, %v467
  %v471 = vmul.f32 %v457, %v464
  %v472 = vmul.f32 %v458, %v468
  %v473 = vld [vmem:[%s12] sm:$0x3]
  %v475 = vlaneseq
  %v476 = vshrl.u32 %v475, 7
  %v477 = vsub.s32 0, %v476
  %v478 = vrot.slane %v473, %v477
  %v479 = vlaneseq
  %v480 = vshrl.u32 %v479, 7
  %v481 = vsub.s32 1, %v480
  %v482 = vrot.slane %v473, %v481
  %v485 = vadd.f32 %v471, %v478
  %v486 = vadd.f32 %v472, %v482
  %v487 = vmax.f32 %v485, 0.0
  %v488 = vmax.f32 %v486, 0.0
  %v489 = vpack.c.bf16 %v487, %v487
  %v490 = vpack.c.bf16 %v488, %v488
  %v491 = vld [vmem:[%s13] sm:$0xff]
  %v492 = vld [vmem:[%s13 + $0x8] sm:$0xff]
  %v493 = vld [vmem:[%s13 + $0x10] sm:$0xff]
  %v494 = vld [vmem:[%s13 + $0x18] sm:$0xff]
  %v495 = vld [vmem:[%s13 + $0x20] sm:$0xff]
  %v496 = vld [vmem:[%s13 + $0x28] sm:$0xff]
  %v497 = vld [vmem:[%s13 + $0x30] sm:$0xff]
  %v498 = vld [vmem:[%s13 + $0x38] sm:$0xff]
  %v499 = vld [vmem:[%s13 + $0x40] sm:$0xff]
  %v500 = vld [vmem:[%s13 + $0x48] sm:$0xff]
  %v501 = vld [vmem:[%s13 + $0x50] sm:$0xff]
  %v502 = vld [vmem:[%s13 + $0x58] sm:$0xff]
  %v503 = vld [vmem:[%s13 + $0x60] sm:$0xff]
  %v504 = vld [vmem:[%s13 + $0x68] sm:$0xff]
  %v505 = vld [vmem:[%s13 + $0x70] sm:$0xff]
  %v506 = vld [vmem:[%s13 + $0x78] sm:$0xff]
  %v507 = vld [vmem:[%s13 + $0x80] sm:$0xff]
  %v508 = vld [vmem:[%s13 + $0x88] sm:$0xff]
  %v509 = vld [vmem:[%s13 + $0x90] sm:$0xff]
  %v510 = vld [vmem:[%s13 + $0x98] sm:$0xff]
  %v511 = vld [vmem:[%s13 + $0xa0] sm:$0xff]
  %v512 = vld [vmem:[%s13 + $0xa8] sm:$0xff]
  %v513 = vld [vmem:[%s13 + $0xb0] sm:$0xff]
  %v514 = vld [vmem:[%s13 + $0xb8] sm:$0xff]
  %v515 = vld [vmem:[%s13 + $0xc0] sm:$0xff]
  %v516 = vld [vmem:[%s13 + $0xc8] sm:$0xff]
  %v517 = vld [vmem:[%s13 + $0xd0] sm:$0xff]
  %v518 = vld [vmem:[%s13 + $0xd8] sm:$0xff]
  %v519 = vld [vmem:[%s13 + $0xe0] sm:$0xff]
  %v520 = vld [vmem:[%s13 + $0xe8] sm:$0xff]
  %v521 = vld [vmem:[%s13 + $0xf0] sm:$0xff]
  %v522 = vld [vmem:[%s13 + $0xf8] sm:$0xff]
  %v523 = vld [vmem:[%s13 + $0x100] sm:$0xff]
  %v524 = vld [vmem:[%s13 + $0x108] sm:$0xff]
  %v525 = vld [vmem:[%s13 + $0x110] sm:$0xff]
  %v526 = vld [vmem:[%s13 + $0x118] sm:$0xff]
  %v527 = vld [vmem:[%s13 + $0x120] sm:$0xff]
  %v528 = vld [vmem:[%s13 + $0x128] sm:$0xff]
  %v529 = vld [vmem:[%s13 + $0x130] sm:$0xff]
  %v530 = vld [vmem:[%s13 + $0x138] sm:$0xff]
  %v531 = vld [vmem:[%s13 + $0x140] sm:$0xff]
  %v532 = vld [vmem:[%s13 + $0x148] sm:$0xff]
  %v533 = vld [vmem:[%s13 + $0x150] sm:$0xff]
  %v534 = vld [vmem:[%s13 + $0x158] sm:$0xff]
  %v535 = vld [vmem:[%s13 + $0x160] sm:$0xff]
  %v536 = vld [vmem:[%s13 + $0x168] sm:$0xff]
  %v537 = vld [vmem:[%s13 + $0x170] sm:$0xff]
  %v538 = vld [vmem:[%s13 + $0x178] sm:$0xff]
  %v539 = vld [vmem:[%s13 + $0x180] sm:$0xff]
  %v540 = vld [vmem:[%s13 + $0x188] sm:$0xff]
  %v541 = vld [vmem:[%s13 + $0x190] sm:$0xff]
  %v542 = vld [vmem:[%s13 + $0x198] sm:$0xff]
  %v543 = vld [vmem:[%s13 + $0x1a0] sm:$0xff]
  %v544 = vld [vmem:[%s13 + $0x1a8] sm:$0xff]
  %v545 = vld [vmem:[%s13 + $0x1b0] sm:$0xff]
  %v546 = vld [vmem:[%s13 + $0x1b8] sm:$0xff]
  %v547 = vld [vmem:[%s13 + $0x1c0] sm:$0xff]
  %v548 = vld [vmem:[%s13 + $0x1c8] sm:$0xff]
  %v549 = vld [vmem:[%s13 + $0x1d0] sm:$0xff]
  %v550 = vld [vmem:[%s13 + $0x1d8] sm:$0xff]
  %v551 = vld [vmem:[%s13 + $0x1e0] sm:$0xff]
  %v552 = vld [vmem:[%s13 + $0x1e8] sm:$0xff]
  %v553 = vld [vmem:[%s13 + $0x1f0] sm:$0xff]
  %v554 = vld [vmem:[%s13 + $0x1f8] sm:$0xff]
  %v555 = vld [vmem:[%s13 + $0x200] sm:$0xff]
  %v556 = vld [vmem:[%s13 + $0x208] sm:$0xff]
  %v557 = vld [vmem:[%s13 + $0x210] sm:$0xff]
  %v558 = vld [vmem:[%s13 + $0x218] sm:$0xff]
  %v559 = vld [vmem:[%s13 + $0x220] sm:$0xff]
  %v560 = vld [vmem:[%s13 + $0x228] sm:$0xff]
  %v561 = vld [vmem:[%s13 + $0x230] sm:$0xff]
  %v562 = vld [vmem:[%s13 + $0x238] sm:$0xff]
  %v563 = vld [vmem:[%s13 + $0x240] sm:$0xff]
  %v564 = vld [vmem:[%s13 + $0x248] sm:$0xff]
  %v565 = vld [vmem:[%s13 + $0x250] sm:$0xff]
  %v566 = vld [vmem:[%s13 + $0x258] sm:$0xff]
  %v567 = vld [vmem:[%s13 + $0x260] sm:$0xff]
  %v568 = vld [vmem:[%s13 + $0x268] sm:$0xff]
  %v569 = vld [vmem:[%s13 + $0x270] sm:$0xff]
  %v570 = vld [vmem:[%s13 + $0x278] sm:$0xff]
  %v571 = vld [vmem:[%s13 + $0x280] sm:$0xff]
  %v572 = vld [vmem:[%s13 + $0x288] sm:$0xff]
  %v573 = vld [vmem:[%s13 + $0x290] sm:$0xff]
  %v574 = vld [vmem:[%s13 + $0x298] sm:$0xff]
  %v575 = vld [vmem:[%s13 + $0x2a0] sm:$0xff]
  %v576 = vld [vmem:[%s13 + $0x2a8] sm:$0xff]
  %v577 = vld [vmem:[%s13 + $0x2b0] sm:$0xff]
  %v578 = vld [vmem:[%s13 + $0x2b8] sm:$0xff]
  %v579 = vld [vmem:[%s13 + $0x2c0] sm:$0xff]
  %v580 = vld [vmem:[%s13 + $0x2c8] sm:$0xff]
  %v581 = vld [vmem:[%s13 + $0x2d0] sm:$0xff]
  %v582 = vld [vmem:[%s13 + $0x2d8] sm:$0xff]
  %v583 = vld [vmem:[%s13 + $0x2e0] sm:$0xff]
  %v584 = vld [vmem:[%s13 + $0x2e8] sm:$0xff]
  %v585 = vld [vmem:[%s13 + $0x2f0] sm:$0xff]
  %v586 = vld [vmem:[%s13 + $0x2f8] sm:$0xff]
  %v587 = vld [vmem:[%s13 + $0x300] sm:$0xff]
  %v588 = vld [vmem:[%s13 + $0x308] sm:$0xff]
  %v589 = vld [vmem:[%s13 + $0x310] sm:$0xff]
  %v590 = vld [vmem:[%s13 + $0x318] sm:$0xff]
  %v591 = vld [vmem:[%s13 + $0x320] sm:$0xff]
  %v592 = vld [vmem:[%s13 + $0x328] sm:$0xff]
  %v593 = vld [vmem:[%s13 + $0x330] sm:$0xff]
  %v594 = vld [vmem:[%s13 + $0x338] sm:$0xff]
  %v595 = vld [vmem:[%s13 + $0x340] sm:$0xff]
  %v596 = vld [vmem:[%s13 + $0x348] sm:$0xff]
  %v597 = vld [vmem:[%s13 + $0x350] sm:$0xff]
  %v598 = vld [vmem:[%s13 + $0x358] sm:$0xff]
  %v599 = vld [vmem:[%s13 + $0x360] sm:$0xff]
  %v600 = vld [vmem:[%s13 + $0x368] sm:$0xff]
  %v601 = vld [vmem:[%s13 + $0x370] sm:$0xff]
  %v602 = vld [vmem:[%s13 + $0x378] sm:$0xff]
  %v603 = vld [vmem:[%s13 + $0x380] sm:$0xff]
  %v604 = vld [vmem:[%s13 + $0x388] sm:$0xff]
  %v605 = vld [vmem:[%s13 + $0x390] sm:$0xff]
  %v606 = vld [vmem:[%s13 + $0x398] sm:$0xff]
  %v607 = vld [vmem:[%s13 + $0x3a0] sm:$0xff]
  %v608 = vld [vmem:[%s13 + $0x3a8] sm:$0xff]
  %v609 = vld [vmem:[%s13 + $0x3b0] sm:$0xff]
  %v610 = vld [vmem:[%s13 + $0x3b8] sm:$0xff]
  %v611 = vld [vmem:[%s13 + $0x3c0] sm:$0xff]
  %v612 = vld [vmem:[%s13 + $0x3c8] sm:$0xff]
  %v613 = vld [vmem:[%s13 + $0x3d0] sm:$0xff]
  %v614 = vld [vmem:[%s13 + $0x3d8] sm:$0xff]
  %v615 = vld [vmem:[%s13 + $0x3e0] sm:$0xff]
  %v616 = vld [vmem:[%s13 + $0x3e8] sm:$0xff]
  %v617 = vld [vmem:[%s13 + $0x3f0] sm:$0xff]
  %v618 = vld [vmem:[%s13 + $0x3f8] sm:$0xff]
  %v619 = vld [vmem:[%s14] sm:$0xff]
  %v621 = vlaneseq
  %v622 = vshrl.u32 %v621, 7
  %v623 = vsub.s32 0, %v622
  %v624 = vrot.slane %v619, %v623
  %v625 = vlaneseq
  %v626 = vshrl.u32 %v625, 7
  %v627 = vsub.s32 1, %v626
  %v628 = vrot.slane %v619, %v627
  %v629 = vlaneseq
  %v630 = vshrl.u32 %v629, 7
  %v631 = vsub.s32 2, %v630
  %v632 = vrot.slane %v619, %v631
  %v633 = vlaneseq
  %v634 = vshrl.u32 %v633, 7
  %v635 = vsub.s32 3, %v634
  %v636 = vrot.slane %v619, %v635
  %v637 = vlaneseq
  %v638 = vshrl.u32 %v637, 7
  %v639 = vsub.s32 4, %v638
  %v640 = vrot.slane %v619, %v639
  %v641 = vlaneseq
  %v642 = vshrl.u32 %v641, 7
  %v643 = vsub.s32 5, %v642
  %v644 = vrot.slane %v619, %v643
  %v645 = vlaneseq
  %v646 = vshrl.u32 %v645, 7
  %v647 = vsub.s32 6, %v646
  %v648 = vrot.slane %v619, %v647
  %v649 = vlaneseq
  %v650 = vshrl.u32 %v649, 7
  %v651 = vsub.s32 7, %v650
  %v652 = vrot.slane %v619, %v651
  %v789 = vunpack.c.l.b16 %v491
  %v790 = vunpack.c.h.b16 %v491
  %v791 = vunpack.c.l.b16 %v492
  %v792 = vunpack.c.h.b16 %v492
  %v793 = vunpack.c.l.b16 %v493
  %v794 = vunpack.c.h.b16 %v493
  %v795 = vunpack.c.l.b16 %v494
  %v796 = vunpack.c.h.b16 %v494
  %v797 = vunpack.c.l.b16 %v495
  %v798 = vunpack.c.h.b16 %v495
  %v799 = vunpack.c.l.b16 %v496
  %v800 = vunpack.c.h.b16 %v496
  %v801 = vunpack.c.l.b16 %v497
  %v802 = vunpack.c.h.b16 %v497
  %v803 = vunpack.c.l.b16 %v498
  %v804 = vunpack.c.h.b16 %v498
  %v805 = vunpack.c.l.b16 %v499
  %v806 = vunpack.c.h.b16 %v499
  %v807 = vunpack.c.l.b16 %v500
  %v808 = vunpack.c.h.b16 %v500
  %v809 = vunpack.c.l.b16 %v501
  %v810 = vunpack.c.h.b16 %v501
  %v811 = vunpack.c.l.b16 %v502
  %v812 = vunpack.c.h.b16 %v502
  %v813 = vunpack.c.l.b16 %v503
  %v814 = vunpack.c.h.b16 %v503
  %v815 = vunpack.c.l.b16 %v504
  %v816 = vunpack.c.h.b16 %v504
  %v817 = vunpack.c.l.b16 %v505
  %v818 = vunpack.c.h.b16 %v505
  %v819 = vunpack.c.l.b16 %v506
  %v820 = vunpack.c.h.b16 %v506
  %v821 = vunpack.c.l.b16 %v507
  %v822 = vunpack.c.h.b16 %v507
  %v823 = vunpack.c.l.b16 %v508
  %v824 = vunpack.c.h.b16 %v508
  %v825 = vunpack.c.l.b16 %v509
  %v826 = vunpack.c.h.b16 %v509
  %v827 = vunpack.c.l.b16 %v510
  %v828 = vunpack.c.h.b16 %v510
  %v829 = vunpack.c.l.b16 %v511
  %v830 = vunpack.c.h.b16 %v511
  %v831 = vunpack.c.l.b16 %v512
  %v832 = vunpack.c.h.b16 %v512
  %v833 = vunpack.c.l.b16 %v513
  %v834 = vunpack.c.h.b16 %v513
  %v835 = vunpack.c.l.b16 %v514
  %v836 = vunpack.c.h.b16 %v514
  %v837 = vunpack.c.l.b16 %v515
  %v838 = vunpack.c.h.b16 %v515
  %v839 = vunpack.c.l.b16 %v516
  %v840 = vunpack.c.h.b16 %v516
  %v841 = vunpack.c.l.b16 %v517
  %v842 = vunpack.c.h.b16 %v517
  %v843 = vunpack.c.l.b16 %v518
  %v844 = vunpack.c.h.b16 %v518
  %v845 = vunpack.c.l.b16 %v519
  %v846 = vunpack.c.h.b16 %v519
  %v847 = vunpack.c.l.b16 %v520
  %v848 = vunpack.c.h.b16 %v520
  %v849 = vunpack.c.l.b16 %v521
  %v850 = vunpack.c.h.b16 %v521
  %v851 = vunpack.c.l.b16 %v522
  %v852 = vunpack.c.h.b16 %v522
  %v853 = vunpack.c.l.b16 %v523
  %v854 = vunpack.c.h.b16 %v523
  %v855 = vunpack.c.l.b16 %v524
  %v856 = vunpack.c.h.b16 %v524
  %v857 = vunpack.c.l.b16 %v525
  %v858 = vunpack.c.h.b16 %v525
  %v859 = vunpack.c.l.b16 %v526
  %v860 = vunpack.c.h.b16 %v526
  %v861 = vunpack.c.l.b16 %v527
  %v862 = vunpack.c.h.b16 %v527
  %v863 = vunpack.c.l.b16 %v528
  %v864 = vunpack.c.h.b16 %v528
  %v865 = vunpack.c.l.b16 %v529
  %v866 = vunpack.c.h.b16 %v529
  %v867 = vunpack.c.l.b16 %v530
  %v868 = vunpack.c.h.b16 %v530
  %v869 = vunpack.c.l.b16 %v531
  %v870 = vunpack.c.h.b16 %v531
  %v871 = vunpack.c.l.b16 %v532
  %v872 = vunpack.c.h.b16 %v532
  %v873 = vunpack.c.l.b16 %v533
  %v874 = vunpack.c.h.b16 %v533
  %v875 = vunpack.c.l.b16 %v534
  %v876 = vunpack.c.h.b16 %v534
  %v877 = vunpack.c.l.b16 %v535
  %v878 = vunpack.c.h.b16 %v535
  %v879 = vunpack.c.l.b16 %v536
  %v880 = vunpack.c.h.b16 %v536
  %v881 = vunpack.c.l.b16 %v537
  %v882 = vunpack.c.h.b16 %v537
  %v883 = vunpack.c.l.b16 %v538
  %v884 = vunpack.c.h.b16 %v538
  %v885 = vunpack.c.l.b16 %v539
  %v886 = vunpack.c.h.b16 %v539
  %v887 = vunpack.c.l.b16 %v540
  %v888 = vunpack.c.h.b16 %v540
  %v889 = vunpack.c.l.b16 %v541
  %v890 = vunpack.c.h.b16 %v541
  %v891 = vunpack.c.l.b16 %v542
  %v892 = vunpack.c.h.b16 %v542
  %v893 = vunpack.c.l.b16 %v543
  %v894 = vunpack.c.h.b16 %v543
  %v895 = vunpack.c.l.b16 %v544
  %v896 = vunpack.c.h.b16 %v544
  %v897 = vunpack.c.l.b16 %v545
  %v898 = vunpack.c.h.b16 %v545
  %v899 = vunpack.c.l.b16 %v546
  %v900 = vunpack.c.h.b16 %v546
  %v901 = vunpack.c.l.b16 %v547
  %v902 = vunpack.c.h.b16 %v547
  %v903 = vunpack.c.l.b16 %v548
  %v904 = vunpack.c.h.b16 %v548
  %v905 = vunpack.c.l.b16 %v549
  %v906 = vunpack.c.h.b16 %v549
  %v907 = vunpack.c.l.b16 %v550
  %v908 = vunpack.c.h.b16 %v550
  %v909 = vunpack.c.l.b16 %v551
  %v910 = vunpack.c.h.b16 %v551
  %v911 = vunpack.c.l.b16 %v552
  %v912 = vunpack.c.h.b16 %v552
  %v913 = vunpack.c.l.b16 %v553
  %v914 = vunpack.c.h.b16 %v553
  %v915 = vunpack.c.l.b16 %v554
  %v916 = vunpack.c.h.b16 %v554
  %v917 = vunpack.c.l.b16 %v555
  %v918 = vunpack.c.h.b16 %v555
  %v919 = vunpack.c.l.b16 %v556
  %v920 = vunpack.c.h.b16 %v556
  %v921 = vunpack.c.l.b16 %v557
  %v922 = vunpack.c.h.b16 %v557
  %v923 = vunpack.c.l.b16 %v558
  %v924 = vunpack.c.h.b16 %v558
  %v925 = vunpack.c.l.b16 %v559
  %v926 = vunpack.c.h.b16 %v559
  %v927 = vunpack.c.l.b16 %v560
  %v928 = vunpack.c.h.b16 %v560
  %v929 = vunpack.c.l.b16 %v561
  %v930 = vunpack.c.h.b16 %v561
  %v931 = vunpack.c.l.b16 %v562
  %v932 = vunpack.c.h.b16 %v562
  %v933 = vunpack.c.l.b16 %v563
  %v934 = vunpack.c.h.b16 %v563
  %v935 = vunpack.c.l.b16 %v564
  %v936 = vunpack.c.h.b16 %v564
  %v937 = vunpack.c.l.b16 %v565
  %v938 = vunpack.c.h.b16 %v565
  %v939 = vunpack.c.l.b16 %v566
  %v940 = vunpack.c.h.b16 %v566
  %v941 = vunpack.c.l.b16 %v567
  %v942 = vunpack.c.h.b16 %v567
  %v943 = vunpack.c.l.b16 %v568
  %v944 = vunpack.c.h.b16 %v568
  %v945 = vunpack.c.l.b16 %v569
  %v946 = vunpack.c.h.b16 %v569
  %v947 = vunpack.c.l.b16 %v570
  %v948 = vunpack.c.h.b16 %v570
  %v949 = vunpack.c.l.b16 %v571
  %v950 = vunpack.c.h.b16 %v571
  %v951 = vunpack.c.l.b16 %v572
  %v952 = vunpack.c.h.b16 %v572
  %v953 = vunpack.c.l.b16 %v573
  %v954 = vunpack.c.h.b16 %v573
  %v955 = vunpack.c.l.b16 %v574
  %v956 = vunpack.c.h.b16 %v574
  %v957 = vunpack.c.l.b16 %v575
  %v958 = vunpack.c.h.b16 %v575
  %v959 = vunpack.c.l.b16 %v576
  %v960 = vunpack.c.h.b16 %v576
  %v961 = vunpack.c.l.b16 %v577
  %v962 = vunpack.c.h.b16 %v577
  %v963 = vunpack.c.l.b16 %v578
  %v964 = vunpack.c.h.b16 %v578
  %v965 = vunpack.c.l.b16 %v579
  %v966 = vunpack.c.h.b16 %v579
  %v967 = vunpack.c.l.b16 %v580
  %v968 = vunpack.c.h.b16 %v580
  %v969 = vunpack.c.l.b16 %v581
  %v970 = vunpack.c.h.b16 %v581
  %v971 = vunpack.c.l.b16 %v582
  %v972 = vunpack.c.h.b16 %v582
  %v973 = vunpack.c.l.b16 %v583
  %v974 = vunpack.c.h.b16 %v583
  %v975 = vunpack.c.l.b16 %v584
  %v976 = vunpack.c.h.b16 %v584
  %v977 = vunpack.c.l.b16 %v585
  %v978 = vunpack.c.h.b16 %v585
  %v979 = vunpack.c.l.b16 %v586
  %v980 = vunpack.c.h.b16 %v586
  %v981 = vunpack.c.l.b16 %v587
  %v982 = vunpack.c.h.b16 %v587
  %v983 = vunpack.c.l.b16 %v588
  %v984 = vunpack.c.h.b16 %v588
  %v985 = vunpack.c.l.b16 %v589
  %v986 = vunpack.c.h.b16 %v589
  %v987 = vunpack.c.l.b16 %v590
  %v988 = vunpack.c.h.b16 %v590
  %v989 = vunpack.c.l.b16 %v591
  %v990 = vunpack.c.h.b16 %v591
  %v991 = vunpack.c.l.b16 %v592
  %v992 = vunpack.c.h.b16 %v592
  %v993 = vunpack.c.l.b16 %v593
  %v994 = vunpack.c.h.b16 %v593
  %v995 = vunpack.c.l.b16 %v594
  %v996 = vunpack.c.h.b16 %v594
  %v997 = vunpack.c.l.b16 %v595
  %v998 = vunpack.c.h.b16 %v595
  %v999 = vunpack.c.l.b16 %v596
  %v1000 = vunpack.c.h.b16 %v596
  %v1001 = vunpack.c.l.b16 %v597
  %v1002 = vunpack.c.h.b16 %v597
  %v1003 = vunpack.c.l.b16 %v598
  %v1004 = vunpack.c.h.b16 %v598
  %v1005 = vunpack.c.l.b16 %v599
  %v1006 = vunpack.c.h.b16 %v599
  %v1007 = vunpack.c.l.b16 %v600
  %v1008 = vunpack.c.h.b16 %v600
  %v1009 = vunpack.c.l.b16 %v601
  %v1010 = vunpack.c.h.b16 %v601
  %v1011 = vunpack.c.l.b16 %v602
  %v1012 = vunpack.c.h.b16 %v602
  %v1013 = vunpack.c.l.b16 %v603
  %v1014 = vunpack.c.h.b16 %v603
  %v1015 = vunpack.c.l.b16 %v604
  %v1016 = vunpack.c.h.b16 %v604
  %v1017 = vunpack.c.l.b16 %v605
  %v1018 = vunpack.c.h.b16 %v605
  %v1019 = vunpack.c.l.b16 %v606
  %v1020 = vunpack.c.h.b16 %v606
  %v1021 = vunpack.c.l.b16 %v607
  %v1022 = vunpack.c.h.b16 %v607
  %v1023 = vunpack.c.l.b16 %v608
  %v1024 = vunpack.c.h.b16 %v608
  %v1025 = vunpack.c.l.b16 %v609
  %v1026 = vunpack.c.h.b16 %v609
  %v1027 = vunpack.c.l.b16 %v610
  %v1028 = vunpack.c.h.b16 %v610
  %v1029 = vunpack.c.l.b16 %v611
  %v1030 = vunpack.c.h.b16 %v611
  %v1031 = vunpack.c.l.b16 %v612
  %v1032 = vunpack.c.h.b16 %v612
  %v1033 = vunpack.c.l.b16 %v613
  %v1034 = vunpack.c.h.b16 %v613
  %v1035 = vunpack.c.l.b16 %v614
  %v1036 = vunpack.c.h.b16 %v614
  %v1037 = vunpack.c.l.b16 %v615
  %v1038 = vunpack.c.h.b16 %v615
  %v1039 = vunpack.c.l.b16 %v616
  %v1040 = vunpack.c.h.b16 %v616
  %v1041 = vunpack.c.l.b16 %v617
  %v1042 = vunpack.c.h.b16 %v617
  %v1043 = vunpack.c.l.b16 %v618
  %v1044 = vunpack.c.h.b16 %v618
  %v1045 = vpack.c.b16 %v797, %v789
  %v1046 = vpack.c.b16 %v798, %v790
  %v1047 = vpack.c.b16 %v799, %v791
  %v1048 = vpack.c.b16 %v800, %v792
  %v1049 = vpack.c.b16 %v801, %v793
  %v1050 = vpack.c.b16 %v802, %v794
  %v1051 = vpack.c.b16 %v803, %v795
  %v1052 = vpack.c.b16 %v804, %v796
  %v1053 = vpack.c.b16 %v813, %v805
  %v1054 = vpack.c.b16 %v814, %v806
  %v1055 = vpack.c.b16 %v815, %v807
  %v1056 = vpack.c.b16 %v816, %v808
  %v1057 = vpack.c.b16 %v817, %v809
  %v1058 = vpack.c.b16 %v818, %v810
  %v1059 = vpack.c.b16 %v819, %v811
  %v1060 = vpack.c.b16 %v820, %v812
  %v1061 = vpack.c.b16 %v829, %v821
  %v1062 = vpack.c.b16 %v830, %v822
  %v1063 = vpack.c.b16 %v831, %v823
  %v1064 = vpack.c.b16 %v832, %v824
  %v1065 = vpack.c.b16 %v833, %v825
  %v1066 = vpack.c.b16 %v834, %v826
  %v1067 = vpack.c.b16 %v835, %v827
  %v1068 = vpack.c.b16 %v836, %v828
  %v1069 = vpack.c.b16 %v845, %v837
  %v1070 = vpack.c.b16 %v846, %v838
  %v1071 = vpack.c.b16 %v847, %v839
  %v1072 = vpack.c.b16 %v848, %v840
  %v1073 = vpack.c.b16 %v849, %v841
  %v1074 = vpack.c.b16 %v850, %v842
  %v1075 = vpack.c.b16 %v851, %v843
  %v1076 = vpack.c.b16 %v852, %v844
  %v1077 = vpack.c.b16 %v861, %v853
  %v1078 = vpack.c.b16 %v862, %v854
  %v1079 = vpack.c.b16 %v863, %v855
  %v1080 = vpack.c.b16 %v864, %v856
  %v1081 = vpack.c.b16 %v865, %v857
  %v1082 = vpack.c.b16 %v866, %v858
  %v1083 = vpack.c.b16 %v867, %v859
  %v1084 = vpack.c.b16 %v868, %v860
  %v1085 = vpack.c.b16 %v877, %v869
  %v1086 = vpack.c.b16 %v878, %v870
  %v1087 = vpack.c.b16 %v879, %v871
  %v1088 = vpack.c.b16 %v880, %v872
  %v1089 = vpack.c.b16 %v881, %v873
  %v1090 = vpack.c.b16 %v882, %v874
  %v1091 = vpack.c.b16 %v883, %v875
  %v1092 = vpack.c.b16 %v884, %v876
  %v1093 = vpack.c.b16 %v893, %v885
  %v1094 = vpack.c.b16 %v894, %v886
  %v1095 = vpack.c.b16 %v895, %v887
  %v1096 = vpack.c.b16 %v896, %v888
  %v1097 = vpack.c.b16 %v897, %v889
  %v1098 = vpack.c.b16 %v898, %v890
  %v1099 = vpack.c.b16 %v899, %v891
  %v1100 = vpack.c.b16 %v900, %v892
  %v1101 = vpack.c.b16 %v909, %v901
  %v1102 = vpack.c.b16 %v910, %v902
  %v1103 = vpack.c.b16 %v911, %v903
  %v1104 = vpack.c.b16 %v912, %v904
  %v1105 = vpack.c.b16 %v913, %v905
  %v1106 = vpack.c.b16 %v914, %v906
  %v1107 = vpack.c.b16 %v915, %v907
  %v1108 = vpack.c.b16 %v916, %v908
  %v1109 = vpack.c.b16 %v925, %v917
  %v1110 = vpack.c.b16 %v926, %v918
  %v1111 = vpack.c.b16 %v927, %v919
  %v1112 = vpack.c.b16 %v928, %v920
  %v1113 = vpack.c.b16 %v929, %v921
  %v1114 = vpack.c.b16 %v930, %v922
  %v1115 = vpack.c.b16 %v931, %v923
  %v1116 = vpack.c.b16 %v932, %v924
  %v1117 = vpack.c.b16 %v941, %v933
  %v1118 = vpack.c.b16 %v942, %v934
  %v1119 = vpack.c.b16 %v943, %v935
  %v1120 = vpack.c.b16 %v944, %v936
  %v1121 = vpack.c.b16 %v945, %v937
  %v1122 = vpack.c.b16 %v946, %v938
  %v1123 = vpack.c.b16 %v947, %v939
  %v1124 = vpack.c.b16 %v948, %v940
  %v1125 = vpack.c.b16 %v957, %v949
  %v1126 = vpack.c.b16 %v958, %v950
  %v1127 = vpack.c.b16 %v959, %v951
  %v1128 = vpack.c.b16 %v960, %v952
  %v1129 = vpack.c.b16 %v961, %v953
  %v1130 = vpack.c.b16 %v962, %v954
  %v1131 = vpack.c.b16 %v963, %v955
  %v1132 = vpack.c.b16 %v964, %v956
  %v1133 = vpack.c.b16 %v973, %v965
  %v1134 = vpack.c.b16 %v974, %v966
  %v1135 = vpack.c.b16 %v975, %v967
  %v1136 = vpack.c.b16 %v976, %v968
  %v1137 = vpack.c.b16 %v977, %v969
  %v1138 = vpack.c.b16 %v978, %v970
  %v1139 = vpack.c.b16 %v979, %v971
  %v1140 = vpack.c.b16 %v980, %v972
  %v1141 = vpack.c.b16 %v989, %v981
  %v1142 = vpack.c.b16 %v990, %v982
  %v1143 = vpack.c.b16 %v991, %v983
  %v1144 = vpack.c.b16 %v992, %v984
  %v1145 = vpack.c.b16 %v993, %v985
  %v1146 = vpack.c.b16 %v994, %v986
  %v1147 = vpack.c.b16 %v995, %v987
  %v1148 = vpack.c.b16 %v996, %v988
  %v1149 = vpack.c.b16 %v1005, %v997
  %v1150 = vpack.c.b16 %v1006, %v998
  %v1151 = vpack.c.b16 %v1007, %v999
  %v1152 = vpack.c.b16 %v1008, %v1000
  %v1153 = vpack.c.b16 %v1009, %v1001
  %v1154 = vpack.c.b16 %v1010, %v1002
  %v1155 = vpack.c.b16 %v1011, %v1003
  %v1156 = vpack.c.b16 %v1012, %v1004
  %v1157 = vpack.c.b16 %v1021, %v1013
  %v1158 = vpack.c.b16 %v1022, %v1014
  %v1159 = vpack.c.b16 %v1023, %v1015
  %v1160 = vpack.c.b16 %v1024, %v1016
  %v1161 = vpack.c.b16 %v1025, %v1017
  %v1162 = vpack.c.b16 %v1026, %v1018
  %v1163 = vpack.c.b16 %v1027, %v1019
  %v1164 = vpack.c.b16 %v1028, %v1020
  %v1165 = vpack.c.b16 %v1037, %v1029
  %v1166 = vpack.c.b16 %v1038, %v1030
  %v1167 = vpack.c.b16 %v1039, %v1031
  %v1168 = vpack.c.b16 %v1040, %v1032
  %v1169 = vpack.c.b16 %v1041, %v1033
  %v1170 = vpack.c.b16 %v1042, %v1034
  %v1171 = vpack.c.b16 %v1043, %v1035
  %v1172 = vpack.c.b16 %v1044, %v1036
  %1301 = vmatprep.subr.bf16.mxu0 %v1046
  %1302 = vmatpush1.bf16.msra.mxu0 %v1045
  %1303 = vmatprep.subr.bf16.mxu0 %v1054
  %1304 = vmatpush1.bf16.msra.mxu0 %v1053
  %1305 = vmatprep.subr.bf16.mxu0 %v1062
  %1306 = vmatpush1.bf16.msra.mxu0 %v1061
  %1307 = vmatprep.subr.bf16.mxu0 %v1070
  %1308 = vmatpush1.bf16.msra.mxu0 %v1069
  %1309 = vmatprep.subr.bf16.mxu0 %v1078
  %1310 = vmatpush1.bf16.msra.mxu0 %v1077
  %1311 = vmatprep.subr.bf16.mxu0 %v1086
  %1312 = vmatpush1.bf16.msra.mxu0 %v1085
  %1313 = vmatprep.subr.bf16.mxu0 %v1094
  %1314 = vmatpush1.bf16.msra.mxu0 %v1093
  %1315 = vmatprep.subr.bf16.mxu0 %v1102
  %1316 = vmatpush1.bf16.msra.mxu0 %v1101
  %1317 = vmatprep.subr.bf16.mxu0 %v1110
  %1318 = vmatpush1.bf16.msra.mxu0 %v1109
  %1319 = vmatprep.subr.bf16.mxu0 %v1118
  %1320 = vmatpush1.bf16.msra.mxu0 %v1117
  %1321 = vmatprep.subr.bf16.mxu0 %v1126
  %1322 = vmatpush1.bf16.msra.mxu0 %v1125
  %1323 = vmatprep.subr.bf16.mxu0 %v1134
  %1324 = vmatpush1.bf16.msra.mxu0 %v1133
  %1325 = vmatprep.subr.bf16.mxu0 %v1142
  %1326 = vmatpush1.bf16.msra.mxu0 %v1141
  %1327 = vmatprep.subr.bf16.mxu0 %v1150
  %1328 = vmatpush1.bf16.msra.mxu0 %v1149
  %1329 = vmatprep.subr.bf16.mxu0 %v1158
  %1330 = vmatpush1.bf16.msra.mxu0 %v1157
  %1331 = vmatprep.subr.bf16.mxu0 %v1166
  %1332 = vmatpush1.bf16.msra.mxu0 %v1165
  %1333 = vmatprep.mubr.bf16.mxu0 %v490
  %1334 = vmatmul.mubr.bf16.gmra.mrb[0].mxu0 %v489
  %v1335 = vpop.f32.mrb[0].mxu0
  %v1336 = vadd.f32 %v624, %v1335
  %v1337 = vpop.f32.mrb[0].mxu0
  %v1338 = vadd.f32 %v628, %v1337
  %v1339 = vpop.f32.mrb[0].mxu0
  %v1340 = vpop.f32.mrb[0].mxu0
  %1341 = vdwg.mxu0
  %1342 = vmatprep.subr.bf16.mxu0 %v1048
  %1343 = vmatpush1.bf16.msra.mxu0 %v1047
  %1344 = vmatprep.subr.bf16.mxu0 %v1056
  %1345 = vmatpush1.bf16.msra.mxu0 %v1055
  %1346 = vmatprep.subr.bf16.mxu0 %v1064
  %1347 = vmatpush1.bf16.msra.mxu0 %v1063
  %1348 = vmatprep.subr.bf16.mxu0 %v1072
  %1349 = vmatpush1.bf16.msra.mxu0 %v1071
  %1350 = vmatprep.subr.bf16.mxu0 %v1080
  %1351 = vmatpush1.bf16.msra.mxu0 %v1079
  %1352 = vmatprep.subr.bf16.mxu0 %v1088
  %1353 = vmatpush1.bf16.msra.mxu0 %v1087
  %1354 = vmatprep.subr.bf16.mxu0 %v1096
  %1355 = vmatpush1.bf16.msra.mxu0 %v1095
  %1356 = vmatprep.subr.bf16.mxu0 %v1104
  %1357 = vmatpush1.bf16.msra.mxu0 %v1103
  %1358 = vmatprep.subr.bf16.mxu0 %v1112
  %1359 = vmatpush1.bf16.msra.mxu0 %v1111
  %1360 = vmatprep.subr.bf16.mxu0 %v1120
  %1361 = vmatpush1.bf16.msra.mxu0 %v1119
  %1362 = vmatprep.subr.bf16.mxu0 %v1128
  %1363 = vmatpush1.bf16.msra.mxu0 %v1127
  %1364 = vmatprep.subr.bf16.mxu0 %v1136
  %1365 = vmatpush1.bf16.msra.mxu0 %v1135
  %1366 = vmatprep.subr.bf16.mxu0 %v1144
  %1367 = vmatpush1.bf16.msra.mxu0 %v1143
  %1368 = vmatprep.subr.bf16.mxu0 %v1152
  %1369 = vmatpush1.bf16.msra.mxu0 %v1151
  %1370 = vmatprep.subr.bf16.mxu0 %v1160
  %1371 = vmatpush1.bf16.msra.mxu0 %v1159
  %1372 = vmatprep.subr.bf16.mxu0 %v1168
  %1373 = vmatpush1.bf16.msra.mxu0 %v1167
  %1374 = vmatprep.mubr.bf16.mxu0 %v490
  %1375 = vmatmul.mubr.bf16.gmra.mrb[0].mxu0 %v489
  %v1376 = vpop.f32.mrb[0].mxu0
  %v1377 = vadd.f32 %v632, %v1376
  %v1378 = vpop.f32.mrb[0].mxu0
  %v1379 = vadd.f32 %v636, %v1378
  %v1380 = vpop.f32.mrb[0].mxu0
  %v1381 = vpop.f32.mrb[0].mxu0
  %1382 = vdwg.mxu0
  %1383 = vmatprep.subr.bf16.mxu0 %v1050
  %1384 = vmatpush1.bf16.msra.mxu0 %v1049
  %1385 = vmatprep.subr.bf16.mxu0 %v1058
  %1386 = vmatpush1.bf16.msra.mxu0 %v1057
  %1387 = vmatprep.subr.bf16.mxu0 %v1066
  %1388 = vmatpush1.bf16.msra.mxu0 %v1065
  %1389 = vmatprep.subr.bf16.mxu0 %v1074
  %1390 = vmatpush1.bf16.msra.mxu0 %v1073
  %1391 = vmatprep.subr.bf16.mxu0 %v1082
  %1392 = vmatpush1.bf16.msra.mxu0 %v1081
  %1393 = vmatprep.subr.bf16.mxu0 %v1090
  %1394 = vmatpush1.bf16.msra.mxu0 %v1089
  %1395 = vmatprep.subr.bf16.mxu0 %v1098
  %1396 = vmatpush1.bf16.msra.mxu0 %v1097
  %1397 = vmatprep.subr.bf16.mxu0 %v1106
  %1398 = vmatpush1.bf16.msra.mxu0 %v1105
  %1399 = vmatprep.subr.bf16.mxu0 %v1114
  %1400 = vmatpush1.bf16.msra.mxu0 %v1113
  %1401 = vmatprep.subr.bf16.mxu0 %v1122
  %1402 = vmatpush1.bf16.msra.mxu0 %v1121
  %1403 = vmatprep.subr.bf16.mxu0 %v1130
  %1404 = vmatpush1.bf16.msra.mxu0 %v1129
  %1405 = vmatprep.subr.bf16.mxu0 %v1138
  %1406 = vmatpush1.bf16.msra.mxu0 %v1137
  %1407 = vmatprep.subr.bf16.mxu0 %v1146
  %1408 = vmatpush1.bf16.msra.mxu0 %v1145
  %1409 = vmatprep.subr.bf16.mxu0 %v1154
  %1410 = vmatpush1.bf16.msra.mxu0 %v1153
  %1411 = vmatprep.subr.bf16.mxu0 %v1162
  %1412 = vmatpush1.bf16.msra.mxu0 %v1161
  %1413 = vmatprep.subr.bf16.mxu0 %v1170
  %1414 = vmatpush1.bf16.msra.mxu0 %v1169
  %1415 = vmatprep.mubr.bf16.mxu0 %v490
  %1416 = vmatmul.mubr.bf16.gmra.mrb[0].mxu0 %v489
  %v1417 = vpop.f32.mrb[0].mxu0
  %v1418 = vadd.f32 %v640, %v1417
  %v1419 = vpop.f32.mrb[0].mxu0
  %v1420 = vadd.f32 %v644, %v1419
  %v1421 = vpop.f32.mrb[0].mxu0
  %v1422 = vpop.f32.mrb[0].mxu0
  %1423 = vdwg.mxu0
  %1424 = vmatprep.subr.bf16.mxu0 %v1052
  %1425 = vmatpush1.bf16.msra.mxu0 %v1051
  %1426 = vmatprep.subr.bf16.mxu0 %v1060
  %1427 = vmatpush1.bf16.msra.mxu0 %v1059
  %1428 = vmatprep.subr.bf16.mxu0 %v1068
  %1429 = vmatpush1.bf16.msra.mxu0 %v1067
  %1430 = vmatprep.subr.bf16.mxu0 %v1076
  %1431 = vmatpush1.bf16.msra.mxu0 %v1075
  %1432 = vmatprep.subr.bf16.mxu0 %v1084
  %1433 = vmatpush1.bf16.msra.mxu0 %v1083
  %1434 = vmatprep.subr.bf16.mxu0 %v1092
  %1435 = vmatpush1.bf16.msra.mxu0 %v1091
  %1436 = vmatprep.subr.bf16.mxu0 %v1100
  %1437 = vmatpush1.bf16.msra.mxu0 %v1099
  %1438 = vmatprep.subr.bf16.mxu0 %v1108
  %1439 = vmatpush1.bf16.msra.mxu0 %v1107
  %1440 = vmatprep.subr.bf16.mxu0 %v1116
  %1441 = vmatpush1.bf16.msra.mxu0 %v1115
  %1442 = vmatprep.subr.bf16.mxu0 %v1124
  %1443 = vmatpush1.bf16.msra.mxu0 %v1123
  %1444 = vmatprep.subr.bf16.mxu0 %v1132
  %1445 = vmatpush1.bf16.msra.mxu0 %v1131
  %1446 = vmatprep.subr.bf16.mxu0 %v1140
  %1447 = vmatpush1.bf16.msra.mxu0 %v1139
  %1448 = vmatprep.subr.bf16.mxu0 %v1148
  %1449 = vmatpush1.bf16.msra.mxu0 %v1147
  %1450 = vmatprep.subr.bf16.mxu0 %v1156
  %1451 = vmatpush1.bf16.msra.mxu0 %v1155
  %1452 = vmatprep.subr.bf16.mxu0 %v1164
  %1453 = vmatpush1.bf16.msra.mxu0 %v1163
  %1454 = vmatprep.subr.bf16.mxu0 %v1172
  %1455 = vmatpush1.bf16.msra.mxu0 %v1171
  %1456 = vmatprep.mubr.bf16.mxu0 %v490
  %1457 = vmatmul.mubr.bf16.gmra.mrb[0].mxu0 %v489
  %v1458 = vpop.f32.mrb[0].mxu0
  %v1459 = vadd.f32 %v648, %v1458
  %v1460 = vpop.f32.mrb[0].mxu0
  %v1461 = vadd.f32 %v652, %v1460
  %v1462 = vpop.f32.mrb[0].mxu0
  %v1463 = vpop.f32.mrb[0].mxu0
  %1464 = vdwg.mxu0
  %v1465 = vmul.f32 %v1336, 0.5
  %v1466 = vmul.f32 %v1338, 0.5
  %v1467 = vmul.f32 %v1377, 0.5
  %v1468 = vmul.f32 %v1379, 0.5
  %v1469 = vmul.f32 %v1418, 0.5
  %v1470 = vmul.f32 %v1420, 0.5
  %v1471 = vmul.f32 %v1459, 0.5
  %v1472 = vmul.f32 %v1461, 0.5
  %v1473 = vtanh.pop %v1465
  %v1474 = vtanh.pop %v1466
  %v1475 = vtanh.pop %v1467
  %v1476 = vtanh.pop %v1468
  %v1477 = vtanh.pop %v1469
  %v1478 = vtanh.pop %v1470
  %v1479 = vtanh.pop %v1471
  %v1480 = vtanh.pop %v1472
  %v1481 = vmul.f32 %v1473, 0.5
  %v1482 = vmul.f32 %v1474, 0.5
  %v1483 = vmul.f32 %v1475, 0.5
  %v1484 = vmul.f32 %v1476, 0.5
  %v1485 = vmul.f32 %v1477, 0.5
  %v1486 = vmul.f32 %v1478, 0.5
  %v1487 = vmul.f32 %v1479, 0.5
  %v1488 = vmul.f32 %v1480, 0.5
  %v1489 = vadd.f32 %v1481, 0.5
  %v1490 = vadd.f32 %v1482, 0.5
  %v1491 = vadd.f32 %v1483, 0.5
  %v1492 = vadd.f32 %v1484, 0.5
  %v1493 = vadd.f32 %v1485, 0.5
  %v1494 = vadd.f32 %v1486, 0.5
  %v1495 = vadd.f32 %v1487, 0.5
  %v1496 = vadd.f32 %v1488, 0.5
  %v1505 = vcombine.low %v1489, %v1490
  %v1506 = vcombine.low %v1491, %v1492
  %v1508 = vunpack.c.l.s4 1983009808
  %v1509 = vunpack.c.0.s8 %v1508
  %v1510 = vlaneseq
  %v1511 = vshrl.u32 %v1510, 7
  %v1512 = vsub.s32 %v1509, %v1511
  %v1513 = vrot.slane %v1505, %v1512
  %v1515 = vunpack.c.l.s4 1983009808
  %v1516 = vunpack.c.0.s8 %v1515
  %v1517 = vlaneseq
  %v1518 = vshrl.u32 %v1517, 7
  %v1519 = vsub.s32 %v1516, %v1518
  %v1520 = vrot.slane %v1506, %v1519
  %v1521 = vcombine.low %v1513, %v1520
  %v1522 = vcombine.low %v1493, %v1494
  %v1523 = vcombine.low %v1495, %v1496
  %v1525 = vunpack.c.l.s4 1983009808
  %v1526 = vunpack.c.0.s8 %v1525
  %v1527 = vlaneseq
  %v1528 = vshrl.u32 %v1527, 7
  %v1529 = vsub.s32 %v1526, %v1528
  %v1530 = vrot.slane %v1522, %v1529
  %v1532 = vunpack.c.l.s4 1983009808
  %v1533 = vunpack.c.0.s8 %v1532
  %v1534 = vlaneseq
  %v1535 = vshrl.u32 %v1534, 7
  %v1536 = vsub.s32 %v1533, %v1535
  %v1537 = vrot.slane %v1523, %v1536
  %v1538 = vcombine.low %v1530, %v1537
  %1541 = vst [vmem:[%s15] sm:$0xff] %v1521
  %1542 = vst [vmem:[%s15 + $0x8] sm:$0xff] %v1538
  // Predicated region
  $region62: #{decoder_forward.1} parent=0 // pred_check
    _
  $region63: #{decoder_forward.1} parent=0 // pred_check_branch
    %1544 = sbr.rel (0) target = $region65
  $region64: #{decoder_forward.1} parent=0 // pred_region
    _
  $region65: #{decoder_forward.1} parent=0 // pred_fallthru
    _
  // Predicated region
  $region66: #{decoder_forward.1} parent=0 // pred_check
    _
  $region67: #{decoder_forward.1} parent=0 // pred_check_branch
    %1546 = sbr.rel (0) target = $region69
  $region68: #{decoder_forward.1} parent=0 // pred_region
    _
  $region69: #{decoder_forward.1} parent=0 // pred_fallthru
    _

</llo_original>
